<compile_context>
chip_gen: v5e
topology: v5e:2x2
jax: 0.10.0
libtpu: 0.0.40
codegen_flags: <defaults>
</compile_context>

<pallas_src>
import jax
import jax.numpy as jnp
from jax.experimental import pallas as pl
from jax.experimental.pallas import tpu as pltpu

LATENT_DIM = 100
K_PAD = 128          # latent dim padded to a full lane width
H1, H2, OUT = 256, 512, 1024


def _round_up(x, m):
    return ((x + m - 1) // m) * m


def generator_kernel(x_ref, w1_ref, b1_ref, w2_ref, b2_ref, w3_ref, b3_ref, o_ref):
    # Layer 1: Linear(128(pad of 100) -> 256) + ReLU   (bf16 operands, f32 acc)
    h1 = jnp.dot(x_ref[...], w1_ref[...], preferred_element_type=jnp.float32)
    h1 = jnp.maximum(h1 + b1_ref[...], 0.0)
    # Layer 2: Linear(256 -> 512) + ReLU
    h2 = jnp.dot(h1.astype(jnp.bfloat16), w2_ref[...],
                 preferred_element_type=jnp.float32)
    h2 = jnp.maximum(h2 + b2_ref[...], 0.0)
    # Layer 3: Linear(512 -> 1024) + Tanh
    h3 = jnp.dot(h2.astype(jnp.bfloat16), w3_ref[...],
                 preferred_element_type=jnp.float32)
    o_ref[...] = jnp.tanh(h3 + b3_ref[...])


def generator_forward(x, params):
    """x: (batch, 100) float32 -> (batch, 1024) float32."""
    w1, b1, w2, b2, w3, b3 = params
    batch, k = x.shape
    assert k == LATENT_DIM, k

    # --- operand prep: pad K 100->128, cast matmul operands to bf16 ----------
    x_p = jnp.pad(x, ((0, 0), (0, K_PAD - k))).astype(jnp.bfloat16)
    w1_b = jnp.pad(w1, ((0, K_PAD - k), (0, 0))).astype(jnp.bfloat16)
    w2_b = w2.astype(jnp.bfloat16)
    w3_b = w3.astype(jnp.bfloat16)

    # --- batch tiling: TB multiple of 8, <= 256; pad batch to multiple of TB -
    tb = min(256, _round_up(batch, 8))
    b_pad = _round_up(batch, tb)
    if b_pad != batch:
        x_p = jnp.pad(x_p, ((0, b_pad - batch), (0, 0)))
    grid = (pl.cdiv(b_pad, tb),)

    def resident(shape):
        # Same block index every grid step -> stays resident in VMEM.
        return pl.BlockSpec(shape, lambda i: tuple(0 for _ in shape))

    flops = 2 * b_pad * (K_PAD * H1 + H1 * H2 + H2 * OUT)
    transcendentals = b_pad * OUT
    bytes_accessed = (
        2 * (K_PAD * H1 + H1 * H2 + H2 * OUT)      # bf16 weights
        + 4 * (H1 + H2 + OUT)                      # f32 biases
        + 2 * b_pad * K_PAD                        # bf16 x
        + 4 * b_pad * OUT                          # f32 out
    )

    out = pl.pallas_call(
        generator_kernel,
        out_shape=jax.ShapeDtypeStruct((b_pad, OUT), jnp.float32),
        grid=grid,
        in_specs=[
            pl.BlockSpec((tb, K_PAD), lambda i: (i, 0)),   # x: tiled over batch
            resident((K_PAD, H1)),
            resident((1, H1)),
            resident((H1, H2)),
            resident((1, H2)),
            resident((H2, OUT)),
            resident((1, OUT)),
        ],
        out_specs=pl.BlockSpec((tb, OUT), lambda i: (i, 0)),
        compiler_params=pltpu.CompilerParams(
            dimension_semantics=("parallel",),
            vmem_limit_bytes=16 << 20,
        ),
        cost_estimate=pl.CostEstimate(
            flops=flops,
            transcendentals=transcendentals,
            bytes_accessed=bytes_accessed,
        ),
    )(x_p, w1_b, b1, w2_b, b2, w3_b, b3)

    return out[:batch]


def init_params(key):
    """Deterministic PyTorch-style Linear init: U(-1/sqrt(fan_in), 1/sqrt(fan_in))."""
    dims = [(LATENT_DIM, H1), (H1, H2), (H2, OUT)]
    params = []
    for (fan_in, fan_out) in dims:
        key, kw, kb = jax.random.split(key, 3)
        bound = 1.0 / jnp.sqrt(jnp.float32(fan_in))
        # weight stored as (in_features, out_features) so kernel does x @ W
        w = jax.random.uniform(kw, (fan_in, fan_out), jnp.float32, -bound, bound)
        b = jax.random.uniform(kb, (1, fan_out), jnp.float32, -bound, bound)
        params.extend([w, b])
    return tuple(params)


def reference_forward_f32(x, params):
    w1, b1, w2, b2, w3, b3 = params
    h1 = jnp.maximum(x @ w1 + b1, 0.0)
    h2 = jnp.maximum(h1 @ w2 + b2, 0.0)
    return jnp.tanh(h2 @ w3 + b3)


def reference_forward_bf16(x, params):
    """Same precision recipe as the kernel (bf16 operands, f32 accumulation)."""
    w1, b1, w2, b2, w3, b3 = params
    bf = jnp.bfloat16
    h1 = jnp.dot(x.astype(bf), w1.astype(bf), preferred_element_type=jnp.float32)
    h1 = jnp.maximum(h1 + b1, 0.0)
    h2 = jnp.dot(h1.astype(bf), w2.astype(bf), preferred_element_type=jnp.float32)
    h2 = jnp.maximum(h2 + b2, 0.0)
    h3 = jnp.dot(h2.astype(bf), w3.astype(bf), preferred_element_type=jnp.float32)
    return jnp.tanh(h3 + b3)


if __name__ == "__main__":
    key = jax.random.PRNGKey(0)
    key, kx = jax.random.split(key)
    batch = 2
    x = jax.random.normal(kx, (batch, LATENT_DIM), jnp.float32)  # latent noise z
    params = init_params(key)

    out = generator_forward(x, params)
    out = jax.block_until_ready(out)
    assert out.shape == (batch, OUT), out.shape

    # Strict check against a matched-precision (bf16-operand) reference.
    ref_bf16 = reference_forward_bf16(x, params)
    assert jnp.allclose(out, ref_bf16, atol=1e-3, rtol=1e-3), "mismatch vs bf16 reference"

    # Loose check against the full-f32 reference (bf16 operand rounding).
    ref_f32 = reference_forward_f32(x, params)
    assert jnp.allclose(out, ref_f32, atol=5e-2, rtol=5e-2), "mismatch vs f32 reference"

    print("KERNEL_OK")
</pallas_src>

<mosaic_0001>
module attributes {stable_mosaic.version = 11 : i64} {
  func.func @generator_kernel(%arg0: i32, %arg1: memref<8x128xbf16, #tpu.memory_space<vmem>>, %arg2: memref<128x256xbf16, #tpu.memory_space<vmem>>, %arg3: memref<1x256xf32, #tpu.memory_space<vmem>>, %arg4: memref<256x512xbf16, #tpu.memory_space<vmem>>, %arg5: memref<1x512xf32, #tpu.memory_space<vmem>>, %arg6: memref<512x1024xbf16, #tpu.memory_space<vmem>>, %arg7: memref<1x1024xf32, #tpu.memory_space<vmem>>, %arg8: memref<8x1024xf32, #tpu.memory_space<vmem>>) attributes {dimension_semantics = [#tpu.dimension_semantics<parallel>], iteration_bounds = array<i64: 1>, scalar_prefetch = 0 : i64, scratch_operands = 0 : i64, tpu.core_type = #tpu.core_type<tc>, window_params = [{transform_indices = @transform_0, window_bounds = array<i64: 8, 128>}, {pipeline_mode = #tpu.pipeline_mode<synchronous>, transform_indices = @transform_1, window_bounds = array<i64: 128, 256>}, {pipeline_mode = #tpu.pipeline_mode<synchronous>, transform_indices = @transform_2, window_bounds = array<i64: 1, 256>}, {pipeline_mode = #tpu.pipeline_mode<synchronous>, transform_indices = @transform_3, window_bounds = array<i64: 256, 512>}, {pipeline_mode = #tpu.pipeline_mode<synchronous>, transform_indices = @transform_4, window_bounds = array<i64: 1, 512>}, {pipeline_mode = #tpu.pipeline_mode<synchronous>, transform_indices = @transform_5, window_bounds = array<i64: 512, 1024>}, {pipeline_mode = #tpu.pipeline_mode<synchronous>, transform_indices = @transform_6, window_bounds = array<i64: 1, 1024>}, {transform_indices = @transform_7, window_bounds = array<i64: 8, 1024>}]} {
    %c0 = arith.constant 0 : index
    %c0_0 = arith.constant 0 : index
    %0 = vector.load %arg1[%c0, %c0_0] : memref<8x128xbf16, #tpu.memory_space<vmem>>, vector<8x128xbf16>
    %c0_1 = arith.constant 0 : index
    %c0_2 = arith.constant 0 : index
    %1 = vector.load %arg2[%c0_1, %c0_2] : memref<128x256xbf16, #tpu.memory_space<vmem>>, vector<128x256xbf16>
    %cst = arith.constant dense<0.000000e+00> : vector<8x256xf32>
    %2 = tpu.matmul %0, %1, %cst {dimension_numbers = #tpu.dot_dimension_numbers<[1], [0], [0], [1], [0, 0, 1, 1], [], []>} : vector<8x128xbf16>, vector<128x256xbf16>, vector<8x256xf32> -> vector<8x256xf32>
    %c0_3 = arith.constant 0 : index
    %c0_4 = arith.constant 0 : index
    %3 = vector.load %arg3[%c0_3, %c0_4] : memref<1x256xf32, #tpu.memory_space<vmem>>, vector<1x256xf32>
    %4 = vector.broadcast %3 : vector<1x256xf32> to vector<8x256xf32>
    %5 = arith.addf %2, %4 : vector<8x256xf32>
    %cst_5 = arith.constant 0.000000e+00 : f32
    %6 = vector.broadcast %cst_5 : f32 to vector<8x256xf32>
    %7 = arith.maximumf %5, %6 : vector<8x256xf32>
    %8 = arith.truncf %7 : vector<8x256xf32> to vector<8x256xbf16>
    %c0_6 = arith.constant 0 : index
    %c0_7 = arith.constant 0 : index
    %9 = vector.load %arg4[%c0_6, %c0_7] : memref<256x512xbf16, #tpu.memory_space<vmem>>, vector<256x512xbf16>
    %cst_8 = arith.constant dense<0.000000e+00> : vector<8x512xf32>
    %10 = tpu.matmul %8, %9, %cst_8 {dimension_numbers = #tpu.dot_dimension_numbers<[1], [0], [0], [1], [0, 0, 1, 1], [], []>} : vector<8x256xbf16>, vector<256x512xbf16>, vector<8x512xf32> -> vector<8x512xf32>
    %c0_9 = arith.constant 0 : index
    %c0_10 = arith.constant 0 : index
    %11 = vector.load %arg5[%c0_9, %c0_10] : memref<1x512xf32, #tpu.memory_space<vmem>>, vector<1x512xf32>
    %12 = vector.broadcast %11 : vector<1x512xf32> to vector<8x512xf32>
    %13 = arith.addf %10, %12 : vector<8x512xf32>
    %cst_11 = arith.constant 0.000000e+00 : f32
    %14 = vector.broadcast %cst_11 : f32 to vector<8x512xf32>
    %15 = arith.maximumf %13, %14 : vector<8x512xf32>
    %16 = arith.truncf %15 : vector<8x512xf32> to vector<8x512xbf16>
    %c0_12 = arith.constant 0 : index
    %c0_13 = arith.constant 0 : index
    %17 = vector.load %arg6[%c0_12, %c0_13] : memref<512x1024xbf16, #tpu.memory_space<vmem>>, vector<512x1024xbf16>
    %cst_14 = arith.constant dense<0.000000e+00> : vector<8x1024xf32>
    %18 = tpu.matmul %16, %17, %cst_14 {dimension_numbers = #tpu.dot_dimension_numbers<[1], [0], [0], [1], [0, 0, 1, 1], [], []>} : vector<8x512xbf16>, vector<512x1024xbf16>, vector<8x1024xf32> -> vector<8x1024xf32>
    %c0_15 = arith.constant 0 : index
    %c0_16 = arith.constant 0 : index
    %19 = vector.load %arg7[%c0_15, %c0_16] : memref<1x1024xf32, #tpu.memory_space<vmem>>, vector<1x1024xf32>
    %20 = vector.broadcast %19 : vector<1x1024xf32> to vector<8x1024xf32>
    %21 = arith.addf %18, %20 : vector<8x1024xf32>
    %22 = math.tanh %21 : vector<8x1024xf32>
    %c0_17 = arith.constant 0 : index
    %c0_18 = arith.constant 0 : index
    %23 = vector.load %arg8[%c0_17, %c0_18] : memref<8x1024xf32, #tpu.memory_space<vmem>>, vector<8x1024xf32>
    tpu.vector_store %arg8[%c0_17, %c0_18], %22 {strides = array<i32>} : memref<8x1024xf32, #tpu.memory_space<vmem>>, vector<8x1024xf32>,
    return
  }
  func.func @transform_0(%arg0: i32) -> (i32, i32) {
    %c0_i32 = arith.constant 0 : i32
    %c0_i32_0 = arith.constant 0 : i32
    return %arg0, %c0_i32 : i32, i32
  }
  func.func @transform_1(%arg0: i32) -> (i32, i32) {
    %c0_i32 = arith.constant 0 : i32
    %c0_i32_0 = arith.constant 0 : i32
    %c0_i32_1 = arith.constant 0 : i32
    return %c0_i32, %c0_i32_0 : i32, i32
  }
  func.func @transform_2(%arg0: i32) -> (i32, i32) {
    %c0_i32 = arith.constant 0 : i32
    %c0_i32_0 = arith.constant 0 : i32
    %c0_i32_1 = arith.constant 0 : i32
    return %c0_i32, %c0_i32_0 : i32, i32
  }
  func.func @transform_3(%arg0: i32) -> (i32, i32) {
    %c0_i32 = arith.constant 0 : i32
    %c0_i32_0 = arith.constant 0 : i32
    %c0_i32_1 = arith.constant 0 : i32
    return %c0_i32, %c0_i32_0 : i32, i32
  }
  func.func @transform_4(%arg0: i32) -> (i32, i32) {
    %c0_i32 = arith.constant 0 : i32
    %c0_i32_0 = arith.constant 0 : i32
    %c0_i32_1 = arith.constant 0 : i32
    return %c0_i32, %c0_i32_0 : i32, i32
  }
  func.func @transform_5(%arg0: i32) -> (i32, i32) {
    %c0_i32 = arith.constant 0 : i32
    %c0_i32_0 = arith.constant 0 : i32
    %c0_i32_1 = arith.constant 0 : i32
    return %c0_i32, %c0_i32_0 : i32, i32
  }
  func.func @transform_6(%arg0: i32) -> (i32, i32) {
    %c0_i32 = arith.constant 0 : i32
    %c0_i32_0 = arith.constant 0 : i32
    %c0_i32_1 = arith.constant 0 : i32
    return %c0_i32, %c0_i32_0 : i32, i32
  }
  func.func @transform_7(%arg0: i32) -> (i32, i32) {
    %c0_i32 = arith.constant 0 : i32
    %c0_i32_0 = arith.constant 0 : i32
    return %arg0, %c0_i32 : i32, i32
  }
}

</mosaic_0001>

<llo_original>
// kernel: tpu_custom_call.1
$region0: #{tpu_custom_call.1}
  #allocation0 [shape = 'u32[]', space=smem, size = 0x4, offset = 0x4, fixed_abs, tag = 'smem constant byte address 0x4 - core index']
  #allocation1 [shape = 'u32[72,128]{1,0:T(1,128)}', space=vmem, size = 0x9000, scoped, tag = 'internal scratch']
  %s0 = inlined_call_operand.hbm [shape: bf16[8,128], index: 0, kind: input, shape index: {}]
  %s1 = inlined_call_operand.hbm [shape: bf16[128,256], index: 1, kind: input, shape index: {}]
  %s2 = inlined_call_operand.hbm [shape: f32[1,256], index: 2, kind: input, shape index: {}]
  %s3 = inlined_call_operand.hbm [shape: bf16[256,512], index: 3, kind: input, shape index: {}]
  %s4 = inlined_call_operand.hbm [shape: f32[1,512], index: 4, kind: input, shape index: {}]
  %s5 = inlined_call_operand.hbm [shape: bf16[512,1024], index: 5, kind: input, shape index: {}]
  %s6 = inlined_call_operand.hbm [shape: f32[1,1024], index: 6, kind: input, shape index: {}]
  %s7 = inlined_call_operand.hbm [shape: f32[8,1024], index: 7, kind: output, shape index: {}]
  %s8 = sld [smem:[#allocation0]]
  $region66: #{tpu_custom_call.1} parent=0
    _
  %s10 = ssub.s32 1, %s8
  %s11 = scalar_select 0, %s10, %s8
  $region1: #{tpu_custom_call.1} parent=0
    #allocation2 [shape = 'u8[2048]{0}', space=vmem, size = 0x800, scoped, tag = 'input window, operand 0, single buffered']
    #allocation3 [shape = 's32[1]{0}', space=sflag, size = 0x4, scoped, tag = 'scoped memory for tpu_custom_call.1']
    #allocation4 [shape = 's32[1]{0}', space=sflag, size = 0x4, scoped, tag = 'scoped memory for tpu_custom_call.1']
    #allocation5 [shape = 'u8[65536]{0}', space=vmem, size = 0x10000, scoped, tag = 'input window, operand 1, single buffered']
    #allocation6 [shape = 's32[1]{0}', space=sflag, size = 0x4, scoped, tag = 'scoped memory for tpu_custom_call.1']
    #allocation7 [shape = 'u8[1024]{0}', space=vmem, size = 0x400, scoped, tag = 'input window, operand 2, single buffered']
    #allocation8 [shape = 'u8[262144]{0}', space=vmem, size = 0x40000, scoped, tag = 'input window, operand 3, single buffered']
    #allocation9 [shape = 's32[1]{0}', space=sflag, size = 0x4, scoped, tag = 'scoped memory for tpu_custom_call.1']
    #allocation10 [shape = 'u8[2048]{0}', space=vmem, size = 0x800, scoped, tag = 'input window, operand 4, single buffered']
    #allocation11 [shape = 'u8[1048576]{0}', space=vmem, size = 0x100000, scoped, tag = 'input window, operand 5, single buffered']
    #allocation12 [shape = 's32[1]{0}', space=sflag, size = 0x4, scoped, tag = 'scoped memory for tpu_custom_call.1']
    #allocation13 [shape = 'u8[4096]{0}', space=vmem, size = 0x1000, scoped, tag = 'input window, operand 6, single buffered']
    #allocation14 [shape = 'u8[32768]{0}', space=vmem, size = 0x8000, scoped, tag = 'output window, operand 0, single buffered']
    %12 = vsyncpa [#allocation3], 0
    %13 = vsyncpa [#allocation6], 0
    %14 = vsyncpa [#allocation9], 0
    %15 = vsyncpa [#allocation12], 0
    %16 = vsyncpa [#allocation4], 0
    // Predicated region
    $region2: #{tpu_custom_call.1} parent=1 // pred_check
      _
    $region3: #{tpu_custom_call.1} parent=1 // pred_check_branch
      %18 = sbr.rel (0) target = $region5
    $region4: #{tpu_custom_call.1} parent=1 // pred_region
      %20 = vsyncadd [#allocation3], 0
      %s22 = sshll.u32 %s0, 4
      %s23 = int_to_ptr.hbm [resolvable:$true] %s22
      %s24 = sshll.u32 [#allocation2], 4
      %s25 = int_to_ptr.vmem [resolvable:$true] %s24
      %27 = dma.hbm_to_vmem [thread:$0]  %s23, 64, %s25, [#allocation3]
    $region5: #{tpu_custom_call.1} parent=1 // pred_fallthru
      _
    // Predicated region
    $region6: #{tpu_custom_call.1} parent=1 // pred_check
      _
    $region7: #{tpu_custom_call.1} parent=1 // pred_check_branch
      %29 = sbr.rel (0) target = $region9
    $region8: #{tpu_custom_call.1} parent=1 // pred_region
      %31 = vsyncadd [#allocation6], 0
      %s32 = sshll.u32 %s1, 4
      %s33 = int_to_ptr.hbm [resolvable:$true] %s32
      %s34 = sshll.u32 [#allocation5], 4
      %s35 = int_to_ptr.vmem [resolvable:$true] %s34
      %40 = dma.hbm_to_vmem [thread:$0]  %s33, 2048, %s35, [#allocation6], 128, 128, 8
    $region9: #{tpu_custom_call.1} parent=1 // pred_fallthru
      _
    // Predicated region
    $region10: #{tpu_custom_call.1} parent=1 // pred_check
      _
    $region11: #{tpu_custom_call.1} parent=1 // pred_check_branch
      %42 = sbr.rel (0) target = $region13
    $region12: #{tpu_custom_call.1} parent=1 // pred_region
      %44 = vsyncadd [#allocation6], 0
      %s46 = sshll.u32 %s2, 4
      %s47 = int_to_ptr.hbm [resolvable:$true] %s46
      %s48 = sshll.u32 [#allocation7], 4
      %s49 = int_to_ptr.vmem [resolvable:$true] %s48
      %51 = dma.hbm_to_vmem [thread:$0]  %s47, 32, %s49, [#allocation6]
    $region13: #{tpu_custom_call.1} parent=1 // pred_fallthru
      _
    // Predicated region
    $region14: #{tpu_custom_call.1} parent=1 // pred_check
      _
    $region15: #{tpu_custom_call.1} parent=1 // pred_check_branch
      %53 = sbr.rel (0) target = $region17
    $region16: #{tpu_custom_call.1} parent=1 // pred_region
      %55 = vsyncadd [#allocation9], 0
      %s56 = sshll.u32 %s3, 4
      %s57 = int_to_ptr.hbm [resolvable:$true] %s56
      %s58 = sshll.u32 [#allocation8], 4
      %s59 = int_to_ptr.vmem [resolvable:$true] %s58
      %64 = dma.hbm_to_vmem [thread:$0]  %s57, 8192, %s59, [#allocation9], 256, 256, 16
    $region17: #{tpu_custom_call.1} parent=1 // pred_fallthru
      _
    // Predicated region
    $region18: #{tpu_custom_call.1} parent=1 // pred_check
      _
    $region19: #{tpu_custom_call.1} parent=1 // pred_check_branch
      %66 = sbr.rel (0) target = $region21
    $region20: #{tpu_custom_call.1} parent=1 // pred_region
      %68 = vsyncadd [#allocation9], 0
      %s70 = sshll.u32 %s4, 4
      %s71 = int_to_ptr.hbm [resolvable:$true] %s70
      %s72 = sshll.u32 [#allocation10], 4
      %s73 = int_to_ptr.vmem [resolvable:$true] %s72
      %75 = dma.hbm_to_vmem [thread:$0]  %s71, 64, %s73, [#allocation9]
    $region21: #{tpu_custom_call.1} parent=1 // pred_fallthru
      _
    // Predicated region
    $region22: #{tpu_custom_call.1} parent=1 // pred_check
      _
    $region23: #{tpu_custom_call.1} parent=1 // pred_check_branch
      %77 = sbr.rel (0) target = $region25
    $region24: #{tpu_custom_call.1} parent=1 // pred_region
      %79 = vsyncadd [#allocation12], 0
      %s80 = sshll.u32 %s5, 4
      %s81 = int_to_ptr.hbm [resolvable:$true] %s80
      %s82 = sshll.u32 [#allocation11], 4
      %s83 = int_to_ptr.vmem [resolvable:$true] %s82
      %88 = dma.hbm_to_vmem [thread:$0]  %s81, 32768, %s83, [#allocation12], 512, 512, 32
    $region25: #{tpu_custom_call.1} parent=1 // pred_fallthru
      _
    // Predicated region
    $region26: #{tpu_custom_call.1} parent=1 // pred_check
      _
    $region27: #{tpu_custom_call.1} parent=1 // pred_check_branch
      %90 = sbr.rel (0) target = $region29
    $region28: #{tpu_custom_call.1} parent=1 // pred_region
      %92 = vsyncadd [#allocation12], 0
      %s94 = sshll.u32 %s6, 4
      %s95 = int_to_ptr.hbm [resolvable:$true] %s94
      %s96 = sshll.u32 [#allocation13], 4
      %s97 = int_to_ptr.vmem [resolvable:$true] %s96
      %99 = dma.hbm_to_vmem [thread:$0]  %s95, 128, %s97, [#allocation12]
    $region29: #{tpu_custom_call.1} parent=1 // pred_fallthru
      _
    // Predicated region
    $region30: #{tpu_custom_call.1} parent=1 // pred_check
      _
    $region31: #{tpu_custom_call.1} parent=1 // pred_check_branch
      %101 = sbr.rel (0) target = $region33
    $region32: #{tpu_custom_call.1} parent=1 // pred_region
      %103 = dma.done [#allocation3], 64
    $region33: #{tpu_custom_call.1} parent=1 // pred_fallthru
      _
    // Predicated region
    $region34: #{tpu_custom_call.1} parent=1 // pred_check
      _
    $region35: #{tpu_custom_call.1} parent=1 // pred_check_branch
      %105 = sbr.rel (0) target = $region37
    $region36: #{tpu_custom_call.1} parent=1 // pred_region
      %107 = dma.done [#allocation6], 2048
    $region37: #{tpu_custom_call.1} parent=1 // pred_fallthru
      _
    // Predicated region
    $region38: #{tpu_custom_call.1} parent=1 // pred_check
      _
    $region39: #{tpu_custom_call.1} parent=1 // pred_check_branch
      %109 = sbr.rel (0) target = $region41
    $region40: #{tpu_custom_call.1} parent=1 // pred_region
      %111 = dma.done [#allocation6], 32
    $region41: #{tpu_custom_call.1} parent=1 // pred_fallthru
      _
    // Predicated region
    $region42: #{tpu_custom_call.1} parent=1 // pred_check
      _
    $region43: #{tpu_custom_call.1} parent=1 // pred_check_branch
      %113 = sbr.rel (0) target = $region45
    $region44: #{tpu_custom_call.1} parent=1 // pred_region
      %115 = dma.done [#allocation9], 8192
    $region45: #{tpu_custom_call.1} parent=1 // pred_fallthru
      _
    // Predicated region
    $region46: #{tpu_custom_call.1} parent=1 // pred_check
      _
    $region47: #{tpu_custom_call.1} parent=1 // pred_check_branch
      %117 = sbr.rel (0) target = $region49
    $region48: #{tpu_custom_call.1} parent=1 // pred_region
      %119 = dma.done [#allocation9], 64
    $region49: #{tpu_custom_call.1} parent=1 // pred_fallthru
      _
    // Predicated region
    $region50: #{tpu_custom_call.1} parent=1 // pred_check
      _
    $region51: #{tpu_custom_call.1} parent=1 // pred_check_branch
      %121 = sbr.rel (0) target = $region53
    $region52: #{tpu_custom_call.1} parent=1 // pred_region
      %123 = dma.done [#allocation12], 32768
    $region53: #{tpu_custom_call.1} parent=1 // pred_fallthru
      _
    // Predicated region
    $region54: #{tpu_custom_call.1} parent=1 // pred_check
      _
    $region55: #{tpu_custom_call.1} parent=1 // pred_check_branch
      %125 = sbr.rel (0) target = $region57
    $region56: #{tpu_custom_call.1} parent=1 // pred_region
      %127 = dma.done [#allocation12], 128
    $region57: #{tpu_custom_call.1} parent=1 // pred_fallthru
      _
    %v128 = vld [vmem:[#allocation2] sm:$0xf]
    %v129 = vld [vmem:[#allocation5] sm:$0xff]
    %v130 = vld [vmem:[#allocation5 + $0x8] sm:$0xff]
    %v131 = vld [vmem:[#allocation5 + $0x10] sm:$0xff]
    %v132 = vld [vmem:[#allocation5 + $0x18] sm:$0xff]
    %v133 = vld [vmem:[#allocation5 + $0x20] sm:$0xff]
    %v134 = vld [vmem:[#allocation5 + $0x28] sm:$0xff]
    %v135 = vld [vmem:[#allocation5 + $0x30] sm:$0xff]
    %v136 = vld [vmem:[#allocation5 + $0x38] sm:$0xff]
    %v137 = vld [vmem:[#allocation5 + $0x40] sm:$0xff]
    %v138 = vld [vmem:[#allocation5 + $0x48] sm:$0xff]
    %v139 = vld [vmem:[#allocation5 + $0x50] sm:$0xff]
    %v140 = vld [vmem:[#allocation5 + $0x58] sm:$0xff]
    %v141 = vld [vmem:[#allocation5 + $0x60] sm:$0xff]
    %v142 = vld [vmem:[#allocation5 + $0x68] sm:$0xff]
    %v143 = vld [vmem:[#allocation5 + $0x70] sm:$0xff]
    %v144 = vld [vmem:[#allocation5 + $0x78] sm:$0xff]
    %v145 = vld [vmem:[#allocation7] sm:$0x3]
    %v147 = vperm.slane %v145, 0
    %v148 = vperm.slane %v145, 1
    %v167 = vunpack.c.l.b16 %v129
    %v168 = vunpack.c.h.b16 %v129
    %v169 = vunpack.c.l.b16 %v130
    %v170 = vunpack.c.h.b16 %v130
    %v171 = vunpack.c.l.b16 %v131
    %v172 = vunpack.c.h.b16 %v131
    %v173 = vunpack.c.l.b16 %v132
    %v174 = vunpack.c.h.b16 %v132
    %v175 = vunpack.c.l.b16 %v133
    %v176 = vunpack.c.h.b16 %v133
    %v177 = vunpack.c.l.b16 %v134
    %v178 = vunpack.c.h.b16 %v134
    %v179 = vunpack.c.l.b16 %v135
    %v180 = vunpack.c.h.b16 %v135
    %v181 = vunpack.c.l.b16 %v136
    %v182 = vunpack.c.h.b16 %v136
    %v183 = vunpack.c.l.b16 %v137
    %v184 = vunpack.c.h.b16 %v137
    %v185 = vunpack.c.l.b16 %v138
    %v186 = vunpack.c.h.b16 %v138
    %v187 = vunpack.c.l.b16 %v139
    %v188 = vunpack.c.h.b16 %v139
    %v189 = vunpack.c.l.b16 %v140
    %v190 = vunpack.c.h.b16 %v140
    %v191 = vunpack.c.l.b16 %v141
    %v192 = vunpack.c.h.b16 %v141
    %v193 = vunpack.c.l.b16 %v142
    %v194 = vunpack.c.h.b16 %v142
    %v195 = vunpack.c.l.b16 %v143
    %v196 = vunpack.c.h.b16 %v143
    %v197 = vunpack.c.l.b16 %v144
    %v198 = vunpack.c.h.b16 %v144
    %v199 = vpack.c.b16 %v169, %v167
    %v200 = vpack.c.b16 %v170, %v168
    %v201 = vpack.c.b16 %v173, %v171
    %v202 = vpack.c.b16 %v174, %v172
    %v203 = vpack.c.b16 %v177, %v175
    %v204 = vpack.c.b16 %v178, %v176
    %v205 = vpack.c.b16 %v181, %v179
    %v206 = vpack.c.b16 %v182, %v180
    %v207 = vpack.c.b16 %v185, %v183
    %v208 = vpack.c.b16 %v186, %v184
    %v209 = vpack.c.b16 %v189, %v187
    %v210 = vpack.c.b16 %v190, %v188
    %v211 = vpack.c.b16 %v193, %v191
    %v212 = vpack.c.b16 %v194, %v192
    %v213 = vpack.c.b16 %v197, %v195
    %v214 = vpack.c.b16 %v198, %v196
    %231 = vmatpush.bf16.msra.mxu0 %v213
    %232 = vmatpush.bf16.msra.mxu0 %v211
    %233 = vmatpush.bf16.msra.mxu0 %v209
    %234 = vmatpush.bf16.msra.mxu0 %v207
    %235 = vmatpush.bf16.msra.mxu0 %v205
    %236 = vmatpush.bf16.msra.mxu0 %v203
    %237 = vmatpush.bf16.msra.mxu0 %v201
    %238 = vmatpush.bf16.msra.mxu0 %v199
    %239 = vmatmul.bf16.gmra.mxu0 %v128
    %v240 = vpop.f32.mrf.mxu0
    %v241 = vadd.f32 %v147, %v240
    %v242 = vpop.f32.mrf.mxu0
    %243 = vdwg.mxu0
    %244 = vmatpush.bf16.msra.mxu0 %v214
    %245 = vmatpush.bf16.msra.mxu0 %v212
    %246 = vmatpush.bf16.msra.mxu0 %v210
    %247 = vmatpush.bf16.msra.mxu0 %v208
    %248 = vmatpush.bf16.msra.mxu0 %v206
    %249 = vmatpush.bf16.msra.mxu0 %v204
    %250 = vmatpush.bf16.msra.mxu0 %v202
    %251 = vmatpush.bf16.msra.mxu0 %v200
    %252 = vmatmul.bf16.gmra.mxu0 %v128
    %v253 = vpop.f32.mrf.mxu0
    %v254 = vadd.f32 %v148, %v253
    %v255 = vpop.f32.mrf.mxu0
    %256 = vdwg.mxu0
    %v257 = vmax.f32 %v241, 0.0
    %v258 = vmax.f32 %v254, 0.0
    %v259 = vpack.c.bf16 %v257, %v257
    %v260 = vpack.c.bf16 %v258, %v258
    %v261 = vld [vmem:[#allocation8] sm:$0xff]
    %v262 = vld [vmem:[#allocation8 + $0x8] sm:$0xff]
    %v263 = vld [vmem:[#allocation8 + $0x10] sm:$0xff]
    %v264 = vld [vmem:[#allocation8 + $0x18] sm:$0xff]
    %v265 = vld [vmem:[#allocation8 + $0x20] sm:$0xff]
    %v266 = vld [vmem:[#allocation8 + $0x28] sm:$0xff]
    %v267 = vld [vmem:[#allocation8 + $0x30] sm:$0xff]
    %v268 = vld [vmem:[#allocation8 + $0x38] sm:$0xff]
    %v269 = vld [vmem:[#allocation8 + $0x40] sm:$0xff]
    %v270 = vld [vmem:[#allocation8 + $0x48] sm:$0xff]
    %v271 = vld [vmem:[#allocation8 + $0x50] sm:$0xff]
    %v272 = vld [vmem:[#allocation8 + $0x58] sm:$0xff]
    %v273 = vld [vmem:[#allocation8 + $0x60] sm:$0xff]
    %v274 = vld [vmem:[#allocation8 + $0x68] sm:$0xff]
    %v275 = vld [vmem:[#allocation8 + $0x70] sm:$0xff]
    %v276 = vld [vmem:[#allocation8 + $0x78] sm:$0xff]
    %v277 = vld [vmem:[#allocation8 + $0x80] sm:$0xff]
    %v278 = vld [vmem:[#allocation8 + $0x88] sm:$0xff]
    %v279 = vld [vmem:[#allocation8 + $0x90] sm:$0xff]
    %v280 = vld [vmem:[#allocation8 + $0x98] sm:$0xff]
    %v281 = vld [vmem:[#allocation8 + $0xa0] sm:$0xff]
    %v282 = vld [vmem:[#allocation8 + $0xa8] sm:$0xff]
    %v283 = vld [vmem:[#allocation8 + $0xb0] sm:$0xff]
    %v284 = vld [vmem:[#allocation8 + $0xb8] sm:$0xff]
    %v285 = vld [vmem:[#allocation8 + $0xc0] sm:$0xff]
    %v286 = vld [vmem:[#allocation8 + $0xc8] sm:$0xff]
    %v287 = vld [vmem:[#allocation8 + $0xd0] sm:$0xff]
    %v288 = vld [vmem:[#allocation8 + $0xd8] sm:$0xff]
    %v289 = vld [vmem:[#allocation8 + $0xe0] sm:$0xff]
    %v290 = vld [vmem:[#allocation8 + $0xe8] sm:$0xff]
    %v291 = vld [vmem:[#allocation8 + $0xf0] sm:$0xff]
    %v292 = vld [vmem:[#allocation8 + $0xf8] sm:$0xff]
    %v293 = vld [vmem:[#allocation8 + $0x100] sm:$0xff]
    %v294 = vld [vmem:[#allocation8 + $0x108] sm:$0xff]
    %v295 = vld [vmem:[#allocation8 + $0x110] sm:$0xff]
    %v296 = vld [vmem:[#allocation8 + $0x118] sm:$0xff]
    %v297 = vld [vmem:[#allocation8 + $0x120] sm:$0xff]
    %v298 = vld [vmem:[#allocation8 + $0x128] sm:$0xff]
    %v299 = vld [vmem:[#allocation8 + $0x130] sm:$0xff]
    %v300 = vld [vmem:[#allocation8 + $0x138] sm:$0xff]
    %v301 = vld [vmem:[#allocation8 + $0x140] sm:$0xff]
    %v302 = vld [vmem:[#allocation8 + $0x148] sm:$0xff]
    %v303 = vld [vmem:[#allocation8 + $0x150] sm:$0xff]
    %v304 = vld [vmem:[#allocation8 + $0x158] sm:$0xff]
    %v305 = vld [vmem:[#allocation8 + $0x160] sm:$0xff]
    %v306 = vld [vmem:[#allocation8 + $0x168] sm:$0xff]
    %v307 = vld [vmem:[#allocation8 + $0x170] sm:$0xff]
    %v308 = vld [vmem:[#allocation8 + $0x178] sm:$0xff]
    %v309 = vld [vmem:[#allocation8 + $0x180] sm:$0xff]
    %v310 = vld [vmem:[#allocation8 + $0x188] sm:$0xff]
    %v311 = vld [vmem:[#allocation8 + $0x190] sm:$0xff]
    %v312 = vld [vmem:[#allocation8 + $0x198] sm:$0xff]
    %v313 = vld [vmem:[#allocation8 + $0x1a0] sm:$0xff]
    %v314 = vld [vmem:[#allocation8 + $0x1a8] sm:$0xff]
    %v315 = vld [vmem:[#allocation8 + $0x1b0] sm:$0xff]
    %v316 = vld [vmem:[#allocation8 + $0x1b8] sm:$0xff]
    %v317 = vld [vmem:[#allocation8 + $0x1c0] sm:$0xff]
    %v318 = vld [vmem:[#allocation8 + $0x1c8] sm:$0xff]
    %v319 = vld [vmem:[#allocation8 + $0x1d0] sm:$0xff]
    %v320 = vld [vmem:[#allocation8 + $0x1d8] sm:$0xff]
    %v321 = vld [vmem:[#allocation8 + $0x1e0] sm:$0xff]
    %v322 = vld [vmem:[#allocation8 + $0x1e8] sm:$0xff]
    %v323 = vld [vmem:[#allocation8 + $0x1f0] sm:$0xff]
    %v324 = vld [vmem:[#allocation8 + $0x1f8] sm:$0xff]
    %v325 = vld [vmem:[#allocation10] sm:$0xf]
    %v327 = vperm.slane %v325, 0
    %v328 = vperm.slane %v325, 1
    %v329 = vperm.slane %v325, 2
    %v330 = vperm.slane %v325, 3
    %v399 = vunpack.c.l.b16 %v261
    %v400 = vunpack.c.h.b16 %v261
    %v401 = vunpack.c.l.b16 %v262
    %v402 = vunpack.c.h.b16 %v262
    %v403 = vunpack.c.l.b16 %v263
    %v404 = vunpack.c.h.b16 %v263
    %v405 = vunpack.c.l.b16 %v264
    %v406 = vunpack.c.h.b16 %v264
    %v407 = vunpack.c.l.b16 %v265
    %v408 = vunpack.c.h.b16 %v265
    %v409 = vunpack.c.l.b16 %v266
    %v410 = vunpack.c.h.b16 %v266
    %v411 = vunpack.c.l.b16 %v267
    %v412 = vunpack.c.h.b16 %v267
    %v413 = vunpack.c.l.b16 %v268
    %v414 = vunpack.c.h.b16 %v268
    %v415 = vunpack.c.l.b16 %v269
    %v416 = vunpack.c.h.b16 %v269
    %v417 = vunpack.c.l.b16 %v270
    %v418 = vunpack.c.h.b16 %v270
    %v419 = vunpack.c.l.b16 %v271
    %v420 = vunpack.c.h.b16 %v271
    %v421 = vunpack.c.l.b16 %v272
    %v422 = vunpack.c.h.b16 %v272
    %v423 = vunpack.c.l.b16 %v273
    %v424 = vunpack.c.h.b16 %v273
    %v425 = vunpack.c.l.b16 %v274
    %v426 = vunpack.c.h.b16 %v274
    %v427 = vunpack.c.l.b16 %v275
    %v428 = vunpack.c.h.b16 %v275
    %v429 = vunpack.c.l.b16 %v276
    %v430 = vunpack.c.h.b16 %v276
    %v431 = vunpack.c.l.b16 %v277
    %v432 = vunpack.c.h.b16 %v277
    %v433 = vunpack.c.l.b16 %v278
    %v434 = vunpack.c.h.b16 %v278
    %v435 = vunpack.c.l.b16 %v279
    %v436 = vunpack.c.h.b16 %v279
    %v437 = vunpack.c.l.b16 %v280
    %v438 = vunpack.c.h.b16 %v280
    %v439 = vunpack.c.l.b16 %v281
    %v440 = vunpack.c.h.b16 %v281
    %v441 = vunpack.c.l.b16 %v282
    %v442 = vunpack.c.h.b16 %v282
    %v443 = vunpack.c.l.b16 %v283
    %v444 = vunpack.c.h.b16 %v283
    %v445 = vunpack.c.l.b16 %v284
    %v446 = vunpack.c.h.b16 %v284
    %v447 = vunpack.c.l.b16 %v285
    %v448 = vunpack.c.h.b16 %v285
    %v449 = vunpack.c.l.b16 %v286
    %v450 = vunpack.c.h.b16 %v286
    %v451 = vunpack.c.l.b16 %v287
    %v452 = vunpack.c.h.b16 %v287
    %v453 = vunpack.c.l.b16 %v288
    %v454 = vunpack.c.h.b16 %v288
    %v455 = vunpack.c.l.b16 %v289
    %v456 = vunpack.c.h.b16 %v289
    %v457 = vunpack.c.l.b16 %v290
    %v458 = vunpack.c.h.b16 %v290
    %v459 = vunpack.c.l.b16 %v291
    %v460 = vunpack.c.h.b16 %v291
    %v461 = vunpack.c.l.b16 %v292
    %v462 = vunpack.c.h.b16 %v292
    %v463 = vunpack.c.l.b16 %v293
    %v464 = vunpack.c.h.b16 %v293
    %v465 = vunpack.c.l.b16 %v294
    %v466 = vunpack.c.h.b16 %v294
    %v467 = vunpack.c.l.b16 %v295
    %v468 = vunpack.c.h.b16 %v295
    %v469 = vunpack.c.l.b16 %v296
    %v470 = vunpack.c.h.b16 %v296
    %v471 = vunpack.c.l.b16 %v297
    %v472 = vunpack.c.h.b16 %v297
    %v473 = vunpack.c.l.b16 %v298
    %v474 = vunpack.c.h.b16 %v298
    %v475 = vunpack.c.l.b16 %v299
    %v476 = vunpack.c.h.b16 %v299
    %v477 = vunpack.c.l.b16 %v300
    %v478 = vunpack.c.h.b16 %v300
    %v479 = vunpack.c.l.b16 %v301
    %v480 = vunpack.c.h.b16 %v301
    %v481 = vunpack.c.l.b16 %v302
    %v482 = vunpack.c.h.b16 %v302
    %v483 = vunpack.c.l.b16 %v303
    %v484 = vunpack.c.h.b16 %v303
    %v485 = vunpack.c.l.b16 %v304
    %v486 = vunpack.c.h.b16 %v304
    %v487 = vunpack.c.l.b16 %v305
    %v488 = vunpack.c.h.b16 %v305
    %v489 = vunpack.c.l.b16 %v306
    %v490 = vunpack.c.h.b16 %v306
    %v491 = vunpack.c.l.b16 %v307
    %v492 = vunpack.c.h.b16 %v307
    %v493 = vunpack.c.l.b16 %v308
    %v494 = vunpack.c.h.b16 %v308
    %v495 = vunpack.c.l.b16 %v309
    %v496 = vunpack.c.h.b16 %v309
    %v497 = vunpack.c.l.b16 %v310
    %v498 = vunpack.c.h.b16 %v310
    %v499 = vunpack.c.l.b16 %v311
    %v500 = vunpack.c.h.b16 %v311
    %v501 = vunpack.c.l.b16 %v312
    %v502 = vunpack.c.h.b16 %v312
    %v503 = vunpack.c.l.b16 %v313
    %v504 = vunpack.c.h.b16 %v313
    %v505 = vunpack.c.l.b16 %v314
    %v506 = vunpack.c.h.b16 %v314
    %v507 = vunpack.c.l.b16 %v315
    %v508 = vunpack.c.h.b16 %v315
    %v509 = vunpack.c.l.b16 %v316
    %v510 = vunpack.c.h.b16 %v316
    %v511 = vunpack.c.l.b16 %v317
    %v512 = vunpack.c.h.b16 %v317
    %v513 = vunpack.c.l.b16 %v318
    %v514 = vunpack.c.h.b16 %v318
    %v515 = vunpack.c.l.b16 %v319
    %v516 = vunpack.c.h.b16 %v319
    %v517 = vunpack.c.l.b16 %v320
    %v518 = vunpack.c.h.b16 %v320
    %v519 = vunpack.c.l.b16 %v321
    %v520 = vunpack.c.h.b16 %v321
    %v521 = vunpack.c.l.b16 %v322
    %v522 = vunpack.c.h.b16 %v322
    %v523 = vunpack.c.l.b16 %v323
    %v524 = vunpack.c.h.b16 %v323
    %v525 = vunpack.c.l.b16 %v324
    %v526 = vunpack.c.h.b16 %v324
    %v527 = vpack.c.b16 %v403, %v399
    %v528 = vpack.c.b16 %v404, %v400
    %v529 = vpack.c.b16 %v405, %v401
    %v530 = vpack.c.b16 %v406, %v402
    %v531 = vpack.c.b16 %v411, %v407
    %v532 = vpack.c.b16 %v412, %v408
    %v533 = vpack.c.b16 %v413, %v409
    %v534 = vpack.c.b16 %v414, %v410
    %v535 = vpack.c.b16 %v419, %v415
    %v536 = vpack.c.b16 %v420, %v416
    %v537 = vpack.c.b16 %v421, %v417
    %v538 = vpack.c.b16 %v422, %v418
    %v539 = vpack.c.b16 %v427, %v423
    %v540 = vpack.c.b16 %v428, %v424
    %v541 = vpack.c.b16 %v429, %v425
    %v542 = vpack.c.b16 %v430, %v426
    %v543 = vpack.c.b16 %v435, %v431
    %v544 = vpack.c.b16 %v436, %v432
    %v545 = vpack.c.b16 %v437, %v433
    %v546 = vpack.c.b16 %v438, %v434
    %v547 = vpack.c.b16 %v443, %v439
    %v548 = vpack.c.b16 %v444, %v440
    %v549 = vpack.c.b16 %v445, %v441
    %v550 = vpack.c.b16 %v446, %v442
    %v551 = vpack.c.b16 %v451, %v447
    %v552 = vpack.c.b16 %v452, %v448
    %v553 = vpack.c.b16 %v453, %v449
    %v554 = vpack.c.b16 %v454, %v450
    %v555 = vpack.c.b16 %v459, %v455
    %v556 = vpack.c.b16 %v460, %v456
    %v557 = vpack.c.b16 %v461, %v457
    %v558 = vpack.c.b16 %v462, %v458
    %v559 = vpack.c.b16 %v467, %v463
    %v560 = vpack.c.b16 %v468, %v464
    %v561 = vpack.c.b16 %v469, %v465
    %v562 = vpack.c.b16 %v470, %v466
    %v563 = vpack.c.b16 %v475, %v471
    %v564 = vpack.c.b16 %v476, %v472
    %v565 = vpack.c.b16 %v477, %v473
    %v566 = vpack.c.b16 %v478, %v474
    %v567 = vpack.c.b16 %v483, %v479
    %v568 = vpack.c.b16 %v484, %v480
    %v569 = vpack.c.b16 %v485, %v481
    %v570 = vpack.c.b16 %v486, %v482
    %v571 = vpack.c.b16 %v491, %v487
    %v572 = vpack.c.b16 %v492, %v488
    %v573 = vpack.c.b16 %v493, %v489
    %v574 = vpack.c.b16 %v494, %v490
    %v575 = vpack.c.b16 %v499, %v495
    %v576 = vpack.c.b16 %v500, %v496
    %v577 = vpack.c.b16 %v501, %v497
    %v578 = vpack.c.b16 %v502, %v498
    %v579 = vpack.c.b16 %v507, %v503
    %v580 = vpack.c.b16 %v508, %v504
    %v581 = vpack.c.b16 %v509, %v505
    %v582 = vpack.c.b16 %v510, %v506
    %v583 = vpack.c.b16 %v515, %v511
    %v584 = vpack.c.b16 %v516, %v512
    %v585 = vpack.c.b16 %v517, %v513
    %v586 = vpack.c.b16 %v518, %v514
    %v587 = vpack.c.b16 %v523, %v519
    %v588 = vpack.c.b16 %v524, %v520
    %v589 = vpack.c.b16 %v525, %v521
    %v590 = vpack.c.b16 %v526, %v522
    %655 = vmatpush.bf16.msra.mxu0 %v555
    %656 = vmatpush.bf16.msra.mxu0 %v551
    %657 = vmatpush.bf16.msra.mxu0 %v547
    %658 = vmatpush.bf16.msra.mxu0 %v543
    %659 = vmatpush.bf16.msra.mxu0 %v539
    %660 = vmatpush.bf16.msra.mxu0 %v535
    %661 = vmatpush.bf16.msra.mxu0 %v531
    %662 = vmatpush.bf16.msra.mxu0 %v527
    %663 = vmatmul.bf16.gmra.mxu0 %v259
    %v664 = vpop.f32.mrf.mxu0
    %v665 = vadd.f32 %v327, %v664
    %v666 = vpop.f32.mrf.mxu0
    %667 = vdwg.mxu0
    %668 = vmatpush.bf16.msra.mxu0 %v587
    %669 = vmatpush.bf16.msra.mxu0 %v583
    %670 = vmatpush.bf16.msra.mxu0 %v579
    %671 = vmatpush.bf16.msra.mxu0 %v575
    %672 = vmatpush.bf16.msra.mxu0 %v571
    %673 = vmatpush.bf16.msra.mxu0 %v567
    %674 = vmatpush.bf16.msra.mxu0 %v563
    %675 = vmatpush.bf16.msra.mxu0 %v559
    %676 = vmatmul.bf16.gmra.mxu0 %v260
    %v677 = vpop.f32.mrf.mxu0
    %v678 = vadd.f32 %v665, %v677
    %v679 = vpop.f32.mrf.mxu0
    %680 = vdwg.mxu0
    %681 = vmatpush.bf16.msra.mxu0 %v556
    %682 = vmatpush.bf16.msra.mxu0 %v552
    %683 = vmatpush.bf16.msra.mxu0 %v548
    %684 = vmatpush.bf16.msra.mxu0 %v544
    %685 = vmatpush.bf16.msra.mxu0 %v540
    %686 = vmatpush.bf16.msra.mxu0 %v536
    %687 = vmatpush.bf16.msra.mxu0 %v532
    %688 = vmatpush.bf16.msra.mxu0 %v528
    %689 = vmatmul.bf16.gmra.mxu0 %v259
    %v690 = vpop.f32.mrf.mxu0
    %v691 = vadd.f32 %v328, %v690
    %v692 = vpop.f32.mrf.mxu0
    %693 = vdwg.mxu0
    %694 = vmatpush.bf16.msra.mxu0 %v588
    %695 = vmatpush.bf16.msra.mxu0 %v584
    %696 = vmatpush.bf16.msra.mxu0 %v580
    %697 = vmatpush.bf16.msra.mxu0 %v576
    %698 = vmatpush.bf16.msra.mxu0 %v572
    %699 = vmatpush.bf16.msra.mxu0 %v568
    %700 = vmatpush.bf16.msra.mxu0 %v564
    %701 = vmatpush.bf16.msra.mxu0 %v560
    %702 = vmatmul.bf16.gmra.mxu0 %v260
    %v703 = vpop.f32.mrf.mxu0
    %v704 = vadd.f32 %v691, %v703
    %v705 = vpop.f32.mrf.mxu0
    %706 = vdwg.mxu0
    %707 = vmatpush.bf16.msra.mxu0 %v557
    %708 = vmatpush.bf16.msra.mxu0 %v553
    %709 = vmatpush.bf16.msra.mxu0 %v549
    %710 = vmatpush.bf16.msra.mxu0 %v545
    %711 = vmatpush.bf16.msra.mxu0 %v541
    %712 = vmatpush.bf16.msra.mxu0 %v537
    %713 = vmatpush.bf16.msra.mxu0 %v533
    %714 = vmatpush.bf16.msra.mxu0 %v529
    %715 = vmatmul.bf16.gmra.mxu0 %v259
    %v716 = vpop.f32.mrf.mxu0
    %v717 = vadd.f32 %v329, %v716
    %v718 = vpop.f32.mrf.mxu0
    %719 = vdwg.mxu0
    %720 = vmatpush.bf16.msra.mxu0 %v589
    %721 = vmatpush.bf16.msra.mxu0 %v585
    %722 = vmatpush.bf16.msra.mxu0 %v581
    %723 = vmatpush.bf16.msra.mxu0 %v577
    %724 = vmatpush.bf16.msra.mxu0 %v573
    %725 = vmatpush.bf16.msra.mxu0 %v569
    %726 = vmatpush.bf16.msra.mxu0 %v565
    %727 = vmatpush.bf16.msra.mxu0 %v561
    %728 = vmatmul.bf16.gmra.mxu0 %v260
    %v729 = vpop.f32.mrf.mxu0
    %v730 = vadd.f32 %v717, %v729
    %v731 = vpop.f32.mrf.mxu0
    %732 = vdwg.mxu0
    %733 = vmatpush.bf16.msra.mxu0 %v558
    %734 = vmatpush.bf16.msra.mxu0 %v554
    %735 = vmatpush.bf16.msra.mxu0 %v550
    %736 = vmatpush.bf16.msra.mxu0 %v546
    %737 = vmatpush.bf16.msra.mxu0 %v542
    %738 = vmatpush.bf16.msra.mxu0 %v538
    %739 = vmatpush.bf16.msra.mxu0 %v534
    %740 = vmatpush.bf16.msra.mxu0 %v530
    %741 = vmatmul.bf16.gmra.mxu0 %v259
    %v742 = vpop.f32.mrf.mxu0
    %v743 = vadd.f32 %v330, %v742
    %v744 = vpop.f32.mrf.mxu0
    %745 = vdwg.mxu0
    %746 = vmatpush.bf16.msra.mxu0 %v590
    %747 = vmatpush.bf16.msra.mxu0 %v586
    %748 = vmatpush.bf16.msra.mxu0 %v582
    %749 = vmatpush.bf16.msra.mxu0 %v578
    %750 = vmatpush.bf16.msra.mxu0 %v574
    %751 = vmatpush.bf16.msra.mxu0 %v570
    %752 = vmatpush.bf16.msra.mxu0 %v566
    %753 = vmatpush.bf16.msra.mxu0 %v562
    %754 = vmatmul.bf16.gmra.mxu0 %v260
    %v755 = vpop.f32.mrf.mxu0
    %v756 = vadd.f32 %v743, %v755
    %v757 = vpop.f32.mrf.mxu0
    %758 = vdwg.mxu0
    %v759 = vmax.f32 %v678, 0.0
    %v760 = vmax.f32 %v704, 0.0
    %v761 = vmax.f32 %v730, 0.0
    %v762 = vmax.f32 %v756, 0.0
    %v763 = vpack.c.bf16 %v759, %v759
    %v764 = vpack.c.bf16 %v760, %v760
    %v765 = vpack.c.bf16 %v761, %v761
    %v766 = vpack.c.bf16 %v762, %v762
    %v767 = vld [vmem:[#allocation11] sm:$0xff]
    %v768 = vld [vmem:[#allocation11 + $0x8] sm:$0xff]
    %v769 = vld [vmem:[#allocation11 + $0x10] sm:$0xff]
    %v770 = vld [vmem:[#allocation11 + $0x18] sm:$0xff]
    %v771 = vld [vmem:[#allocation11 + $0x20] sm:$0xff]
    %v772 = vld [vmem:[#allocation11 + $0x28] sm:$0xff]
    %v773 = vld [vmem:[#allocation11 + $0x30] sm:$0xff]
    %v774 = vld [vmem:[#allocation11 + $0x38] sm:$0xff]
    %v775 = vld [vmem:[#allocation11 + $0x40] sm:$0xff]
    %v776 = vld [vmem:[#allocation11 + $0x48] sm:$0xff]
    %v777 = vld [vmem:[#allocation11 + $0x50] sm:$0xff]
    %v778 = vld [vmem:[#allocation11 + $0x58] sm:$0xff]
    %v779 = vld [vmem:[#allocation11 + $0x60] sm:$0xff]
    %v780 = vld [vmem:[#allocation11 + $0x68] sm:$0xff]
    %v781 = vld [vmem:[#allocation11 + $0x70] sm:$0xff]
    %v782 = vld [vmem:[#allocation11 + $0x78] sm:$0xff]
    %v783 = vld [vmem:[#allocation11 + $0x80] sm:$0xff]
    %v784 = vld [vmem:[#allocation11 + $0x88] sm:$0xff]
    %v785 = vld [vmem:[#allocation11 + $0x90] sm:$0xff]
    %v786 = vld [vmem:[#allocation11 + $0x98] sm:$0xff]
    %v787 = vld [vmem:[#allocation11 + $0xa0] sm:$0xff]
    %v788 = vld [vmem:[#allocation11 + $0xa8] sm:$0xff]
    %v789 = vld [vmem:[#allocation11 + $0xb0] sm:$0xff]
    %v790 = vld [vmem:[#allocation11 + $0xb8] sm:$0xff]
    %v791 = vld [vmem:[#allocation11 + $0xc0] sm:$0xff]
    %v792 = vld [vmem:[#allocation11 + $0xc8] sm:$0xff]
    %v793 = vld [vmem:[#allocation11 + $0xd0] sm:$0xff]
    %v794 = vld [vmem:[#allocation11 + $0xd8] sm:$0xff]
    %v795 = vld [vmem:[#allocation11 + $0xe0] sm:$0xff]
    %v796 = vld [vmem:[#allocation11 + $0xe8] sm:$0xff]
    %v797 = vld [vmem:[#allocation11 + $0xf0] sm:$0xff]
    %v798 = vld [vmem:[#allocation11 + $0xf8] sm:$0xff]
    %v799 = vld [vmem:[#allocation11 + $0x100] sm:$0xff]
    %v800 = vld [vmem:[#allocation11 + $0x108] sm:$0xff]
    %v801 = vld [vmem:[#allocation11 + $0x110] sm:$0xff]
    %v802 = vld [vmem:[#allocation11 + $0x118] sm:$0xff]
    %v803 = vld [vmem:[#allocation11 + $0x120] sm:$0xff]
    %v804 = vld [vmem:[#allocation11 + $0x128] sm:$0xff]
    %v805 = vld [vmem:[#allocation11 + $0x130] sm:$0xff]
    %v806 = vld [vmem:[#allocation11 + $0x138] sm:$0xff]
    %v807 = vld [vmem:[#allocation11 + $0x140] sm:$0xff]
    %v808 = vld [vmem:[#allocation11 + $0x148] sm:$0xff]
    %v809 = vld [vmem:[#allocation11 + $0x150] sm:$0xff]
    %v810 = vld [vmem:[#allocation11 + $0x158] sm:$0xff]
    %v811 = vld [vmem:[#allocation11 + $0x160] sm:$0xff]
    %v812 = vld [vmem:[#allocation11 + $0x168] sm:$0xff]
    %v813 = vld [vmem:[#allocation11 + $0x170] sm:$0xff]
    %v814 = vld [vmem:[#allocation11 + $0x178] sm:$0xff]
    %v815 = vld [vmem:[#allocation11 + $0x180] sm:$0xff]
    %v816 = vld [vmem:[#allocation11 + $0x188] sm:$0xff]
    %v817 = vld [vmem:[#allocation11 + $0x190] sm:$0xff]
    %v818 = vld [vmem:[#allocation11 + $0x198] sm:$0xff]
    %v819 = vld [vmem:[#allocation11 + $0x1a0] sm:$0xff]
    %v820 = vld [vmem:[#allocation11 + $0x1a8] sm:$0xff]
    %v821 = vld [vmem:[#allocation11 + $0x1b0] sm:$0xff]
    %v822 = vld [vmem:[#allocation11 + $0x1b8] sm:$0xff]
    %v823 = vld [vmem:[#allocation11 + $0x1c0] sm:$0xff]
    %v824 = vld [vmem:[#allocation11 + $0x1c8] sm:$0xff]
    %v825 = vld [vmem:[#allocation11 + $0x1d0] sm:$0xff]
    %v826 = vld [vmem:[#allocation11 + $0x1d8] sm:$0xff]
    %v827 = vld [vmem:[#allocation11 + $0x1e0] sm:$0xff]
    %v828 = vld [vmem:[#allocation11 + $0x1e8] sm:$0xff]
    %v829 = vld [vmem:[#allocation11 + $0x1f0] sm:$0xff]
    %v830 = vld [vmem:[#allocation11 + $0x1f8] sm:$0xff]
    %v831 = vld [vmem:[#allocation11 + $0x200] sm:$0xff]
    %v832 = vld [vmem:[#allocation11 + $0x208] sm:$0xff]
    %v833 = vld [vmem:[#allocation11 + $0x210] sm:$0xff]
    %v834 = vld [vmem:[#allocation11 + $0x218] sm:$0xff]
    %v835 = vld [vmem:[#allocation11 + $0x220] sm:$0xff]
    %v836 = vld [vmem:[#allocation11 + $0x228] sm:$0xff]
    %v837 = vld [vmem:[#allocation11 + $0x230] sm:$0xff]
    %v838 = vld [vmem:[#allocation11 + $0x238] sm:$0xff]
    %v839 = vld [vmem:[#allocation11 + $0x240] sm:$0xff]
    %v840 = vld [vmem:[#allocation11 + $0x248] sm:$0xff]
    %v841 = vld [vmem:[#allocation11 + $0x250] sm:$0xff]
    %v842 = vld [vmem:[#allocation11 + $0x258] sm:$0xff]
    %v843 = vld [vmem:[#allocation11 + $0x260] sm:$0xff]
    %v844 = vld [vmem:[#allocation11 + $0x268] sm:$0xff]
    %v845 = vld [vmem:[#allocation11 + $0x270] sm:$0xff]
    %v846 = vld [vmem:[#allocation11 + $0x278] sm:$0xff]
    %v847 = vld [vmem:[#allocation11 + $0x280] sm:$0xff]
    %v848 = vld [vmem:[#allocation11 + $0x288] sm:$0xff]
    %v849 = vld [vmem:[#allocation11 + $0x290] sm:$0xff]
    %v850 = vld [vmem:[#allocation11 + $0x298] sm:$0xff]
    %v851 = vld [vmem:[#allocation11 + $0x2a0] sm:$0xff]
    %v852 = vld [vmem:[#allocation11 + $0x2a8] sm:$0xff]
    %v853 = vld [vmem:[#allocation11 + $0x2b0] sm:$0xff]
    %v854 = vld [vmem:[#allocation11 + $0x2b8] sm:$0xff]
    %v855 = vld [vmem:[#allocation11 + $0x2c0] sm:$0xff]
    %v856 = vld [vmem:[#allocation11 + $0x2c8] sm:$0xff]
    %v857 = vld [vmem:[#allocation11 + $0x2d0] sm:$0xff]
    %v858 = vld [vmem:[#allocation11 + $0x2d8] sm:$0xff]
    %v859 = vld [vmem:[#allocation11 + $0x2e0] sm:$0xff]
    %v860 = vld [vmem:[#allocation11 + $0x2e8] sm:$0xff]
    %v861 = vld [vmem:[#allocation11 + $0x2f0] sm:$0xff]
    %v862 = vld [vmem:[#allocation11 + $0x2f8] sm:$0xff]
    %v863 = vld [vmem:[#allocation11 + $0x300] sm:$0xff]
    %v864 = vld [vmem:[#allocation11 + $0x308] sm:$0xff]
    %v865 = vld [vmem:[#allocation11 + $0x310] sm:$0xff]
    %v866 = vld [vmem:[#allocation11 + $0x318] sm:$0xff]
    %v867 = vld [vmem:[#allocation11 + $0x320] sm:$0xff]
    %v868 = vld [vmem:[#allocation11 + $0x328] sm:$0xff]
    %v869 = vld [vmem:[#allocation11 + $0x330] sm:$0xff]
    %v870 = vld [vmem:[#allocation11 + $0x338] sm:$0xff]
    %v871 = vld [vmem:[#allocation11 + $0x340] sm:$0xff]
    %v872 = vld [vmem:[#allocation11 + $0x348] sm:$0xff]
    %v873 = vld [vmem:[#allocation11 + $0x350] sm:$0xff]
    %v874 = vld [vmem:[#allocation11 + $0x358] sm:$0xff]
    %v875 = vld [vmem:[#allocation11 + $0x360] sm:$0xff]
    %v876 = vld [vmem:[#allocation11 + $0x368] sm:$0xff]
    %v877 = vld [vmem:[#allocation11 + $0x370] sm:$0xff]
    %v878 = vld [vmem:[#allocation11 + $0x378] sm:$0xff]
    %v879 = vld [vmem:[#allocation11 + $0x380] sm:$0xff]
    %v880 = vld [vmem:[#allocation11 + $0x388] sm:$0xff]
    %v881 = vld [vmem:[#allocation11 + $0x390] sm:$0xff]
    %v882 = vld [vmem:[#allocation11 + $0x398] sm:$0xff]
    %v883 = vld [vmem:[#allocation11 + $0x3a0] sm:$0xff]
    %v884 = vld [vmem:[#allocation11 + $0x3a8] sm:$0xff]
    %v885 = vld [vmem:[#allocation11 + $0x3b0] sm:$0xff]
    %v886 = vld [vmem:[#allocation11 + $0x3b8] sm:$0xff]
    %v887 = vld [vmem:[#allocation11 + $0x3c0] sm:$0xff]
    %v888 = vld [vmem:[#allocation11 + $0x3c8] sm:$0xff]
    %v889 = vld [vmem:[#allocation11 + $0x3d0] sm:$0xff]
    %v890 = vld [vmem:[#allocation11 + $0x3d8] sm:$0xff]
    %v891 = vld [vmem:[#allocation11 + $0x3e0] sm:$0xff]
    %v892 = vld [vmem:[#allocation11 + $0x3e8] sm:$0xff]
    %v893 = vld [vmem:[#allocation11 + $0x3f0] sm:$0xff]
    %v894 = vld [vmem:[#allocation11 + $0x3f8] sm:$0xff]
    %v895 = vld [vmem:[#allocation11 + $0x400] sm:$0xff]
    %v896 = vld [vmem:[#allocation11 + $0x408] sm:$0xff]
    %v897 = vld [vmem:[#allocation11 + $0x410] sm:$0xff]
    %v898 = vld [vmem:[#allocation11 + $0x418] sm:$0xff]
    %v899 = vld [vmem:[#allocation11 + $0x420] sm:$0xff]
    %v900 = vld [vmem:[#allocation11 + $0x428] sm:$0xff]
    %v901 = vld [vmem:[#allocation11 + $0x430] sm:$0xff]
    %v902 = vld [vmem:[#allocation11 + $0x438] sm:$0xff]
    %v903 = vld [vmem:[#allocation11 + $0x440] sm:$0xff]
    %v904 = vld [vmem:[#allocation11 + $0x448] sm:$0xff]
    %v905 = vld [vmem:[#allocation11 + $0x450] sm:$0xff]
    %v906 = vld [vmem:[#allocation11 + $0x458] sm:$0xff]
    %v907 = vld [vmem:[#allocation11 + $0x460] sm:$0xff]
    %v908 = vld [vmem:[#allocation11 + $0x468] sm:$0xff]
    %v909 = vld [vmem:[#allocation11 + $0x470] sm:$0xff]
    %v910 = vld [vmem:[#allocation11 + $0x478] sm:$0xff]
    %v911 = vld [vmem:[#allocation11 + $0x480] sm:$0xff]
    %v912 = vld [vmem:[#allocation11 + $0x488] sm:$0xff]
    %v913 = vld [vmem:[#allocation11 + $0x490] sm:$0xff]
    %v914 = vld [vmem:[#allocation11 + $0x498] sm:$0xff]
    %v915 = vld [vmem:[#allocation11 + $0x4a0] sm:$0xff]
    %v916 = vld [vmem:[#allocation11 + $0x4a8] sm:$0xff]
    %v917 = vld [vmem:[#allocation11 + $0x4b0] sm:$0xff]
    %v918 = vld [vmem:[#allocation11 + $0x4b8] sm:$0xff]
    %v919 = vld [vmem:[#allocation11 + $0x4c0] sm:$0xff]
    %v920 = vld [vmem:[#allocation11 + $0x4c8] sm:$0xff]
    %v921 = vld [vmem:[#allocation11 + $0x4d0] sm:$0xff]
    %v922 = vld [vmem:[#allocation11 + $0x4d8] sm:$0xff]
    %v923 = vld [vmem:[#allocation11 + $0x4e0] sm:$0xff]
    %v924 = vld [vmem:[#allocation11 + $0x4e8] sm:$0xff]
    %v925 = vld [vmem:[#allocation11 + $0x4f0] sm:$0xff]
    %v926 = vld [vmem:[#allocation11 + $0x4f8] sm:$0xff]
    %v927 = vld [vmem:[#allocation11 + $0x500] sm:$0xff]
    %v928 = vld [vmem:[#allocation11 + $0x508] sm:$0xff]
    %v929 = vld [vmem:[#allocation11 + $0x510] sm:$0xff]
    %v930 = vld [vmem:[#allocation11 + $0x518] sm:$0xff]
    %v931 = vld [vmem:[#allocation11 + $0x520] sm:$0xff]
    %v932 = vld [vmem:[#allocation11 + $0x528] sm:$0xff]
    %v933 = vld [vmem:[#allocation11 + $0x530] sm:$0xff]
    %v934 = vld [vmem:[#allocation11 + $0x538] sm:$0xff]
    %v935 = vld [vmem:[#allocation11 + $0x540] sm:$0xff]
    %v936 = vld [vmem:[#allocation11 + $0x548] sm:$0xff]
    %v937 = vld [vmem:[#allocation11 + $0x550] sm:$0xff]
    %v938 = vld [vmem:[#allocation11 + $0x558] sm:$0xff]
    %v939 = vld [vmem:[#allocation11 + $0x560] sm:$0xff]
    %v940 = vld [vmem:[#allocation11 + $0x568] sm:$0xff]
    %v941 = vld [vmem:[#allocation11 + $0x570] sm:$0xff]
    %v942 = vld [vmem:[#allocation11 + $0x578] sm:$0xff]
    %v943 = vld [vmem:[#allocation11 + $0x580] sm:$0xff]
    %v944 = vld [vmem:[#allocation11 + $0x588] sm:$0xff]
    %v945 = vld [vmem:[#allocation11 + $0x590] sm:$0xff]
    %v946 = vld [vmem:[#allocation11 + $0x598] sm:$0xff]
    %v947 = vld [vmem:[#allocation11 + $0x5a0] sm:$0xff]
    %v948 = vld [vmem:[#allocation11 + $0x5a8] sm:$0xff]
    %v949 = vld [vmem:[#allocation11 + $0x5b0] sm:$0xff]
    %v950 = vld [vmem:[#allocation11 + $0x5b8] sm:$0xff]
    %v951 = vld [vmem:[#allocation11 + $0x5c0] sm:$0xff]
    %v952 = vld [vmem:[#allocation11 + $0x5c8] sm:$0xff]
    %v953 = vld [vmem:[#allocation11 + $0x5d0] sm:$0xff]
    %v954 = vld [vmem:[#allocation11 + $0x5d8] sm:$0xff]
    %v955 = vld [vmem:[#allocation11 + $0x5e0] sm:$0xff]
    %v956 = vld [vmem:[#allocation11 + $0x5e8] sm:$0xff]
    %v957 = vld [vmem:[#allocation11 + $0x5f0] sm:$0xff]
    %v958 = vld [vmem:[#allocation11 + $0x5f8] sm:$0xff]
    %v959 = vld [vmem:[#allocation11 + $0x600] sm:$0xff]
    %v960 = vld [vmem:[#allocation11 + $0x608] sm:$0xff]
    %v961 = vld [vmem:[#allocation11 + $0x610] sm:$0xff]
    %v962 = vld [vmem:[#allocation11 + $0x618] sm:$0xff]
    %v963 = vld [vmem:[#allocation11 + $0x620] sm:$0xff]
    %v964 = vld [vmem:[#allocation11 + $0x628] sm:$0xff]
    %v965 = vld [vmem:[#allocation11 + $0x630] sm:$0xff]
    %v966 = vld [vmem:[#allocation11 + $0x638] sm:$0xff]
    %v967 = vld [vmem:[#allocation11 + $0x640] sm:$0xff]
    %v968 = vld [vmem:[#allocation11 + $0x648] sm:$0xff]
    %v969 = vld [vmem:[#allocation11 + $0x650] sm:$0xff]
    %v970 = vld [vmem:[#allocation11 + $0x658] sm:$0xff]
    %v971 = vld [vmem:[#allocation11 + $0x660] sm:$0xff]
    %v972 = vld [vmem:[#allocation11 + $0x668] sm:$0xff]
    %v973 = vld [vmem:[#allocation11 + $0x670] sm:$0xff]
    %v974 = vld [vmem:[#allocation11 + $0x678] sm:$0xff]
    %v975 = vld [vmem:[#allocation11 + $0x680] sm:$0xff]
    %v976 = vld [vmem:[#allocation11 + $0x688] sm:$0xff]
    %v977 = vld [vmem:[#allocation11 + $0x690] sm:$0xff]
    %v978 = vld [vmem:[#allocation11 + $0x698] sm:$0xff]
    %v979 = vld [vmem:[#allocation11 + $0x6a0] sm:$0xff]
    %v980 = vld [vmem:[#allocation11 + $0x6a8] sm:$0xff]
    %v981 = vld [vmem:[#allocation11 + $0x6b0] sm:$0xff]
    %v982 = vld [vmem:[#allocation11 + $0x6b8] sm:$0xff]
    %v983 = vld [vmem:[#allocation11 + $0x6c0] sm:$0xff]
    %v984 = vld [vmem:[#allocation11 + $0x6c8] sm:$0xff]
    %v985 = vld [vmem:[#allocation11 + $0x6d0] sm:$0xff]
    %v986 = vld [vmem:[#allocation11 + $0x6d8] sm:$0xff]
    %v987 = vld [vmem:[#allocation11 + $0x6e0] sm:$0xff]
    %v988 = vld [vmem:[#allocation11 + $0x6e8] sm:$0xff]
    %v989 = vld [vmem:[#allocation11 + $0x6f0] sm:$0xff]
    %v990 = vld [vmem:[#allocation11 + $0x6f8] sm:$0xff]
    %v991 = vld [vmem:[#allocation11 + $0x700] sm:$0xff]
    %v992 = vld [vmem:[#allocation11 + $0x708] sm:$0xff]
    %v993 = vld [vmem:[#allocation11 + $0x710] sm:$0xff]
    %v994 = vld [vmem:[#allocation11 + $0x718] sm:$0xff]
    %v995 = vld [vmem:[#allocation11 + $0x720] sm:$0xff]
    %v996 = vld [vmem:[#allocation11 + $0x728] sm:$0xff]
    %v997 = vld [vmem:[#allocation11 + $0x730] sm:$0xff]
    %v998 = vld [vmem:[#allocation11 + $0x738] sm:$0xff]
    %v999 = vld [vmem:[#allocation11 + $0x740] sm:$0xff]
    %v1000 = vld [vmem:[#allocation11 + $0x748] sm:$0xff]
    %v1001 = vld [vmem:[#allocation11 + $0x750] sm:$0xff]
    %v1002 = vld [vmem:[#allocation11 + $0x758] sm:$0xff]
    %v1003 = vld [vmem:[#allocation11 + $0x760] sm:$0xff]
    %v1004 = vld [vmem:[#allocation11 + $0x768] sm:$0xff]
    %v1005 = vld [vmem:[#allocation11 + $0x770] sm:$0xff]
    %v1006 = vld [vmem:[#allocation11 + $0x778] sm:$0xff]
    %v1007 = vld [vmem:[#allocation11 + $0x780] sm:$0xff]
    %v1008 = vld [vmem:[#allocation11 + $0x788] sm:$0xff]
    %v1009 = vld [vmem:[#allocation11 + $0x790] sm:$0xff]
    %v1010 = vld [vmem:[#allocation11 + $0x798] sm:$0xff]
    %v1011 = vld [vmem:[#allocation11 + $0x7a0] sm:$0xff]
    %v1012 = vld [vmem:[#allocation11 + $0x7a8] sm:$0xff]
    %v1013 = vld [vmem:[#allocation11 + $0x7b0] sm:$0xff]
    %v1014 = vld [vmem:[#allocation11 + $0x7b8] sm:$0xff]
    %v1015 = vld [vmem:[#allocation11 + $0x7c0] sm:$0xff]
    %v1016 = vld [vmem:[#allocation11 + $0x7c8] sm:$0xff]
    %v1017 = vld [vmem:[#allocation11 + $0x7d0] sm:$0xff]
    %v1018 = vld [vmem:[#allocation11 + $0x7d8] sm:$0xff]
    %v1019 = vld [vmem:[#allocation11 + $0x7e0] sm:$0xff]
    %v1020 = vld [vmem:[#allocation11 + $0x7e8] sm:$0xff]
    %v1021 = vld [vmem:[#allocation11 + $0x7f0] sm:$0xff]
    %v1022 = vld [vmem:[#allocation11 + $0x7f8] sm:$0xff]
    %v1023 = vld [vmem:[#allocation13] sm:$0xff]
    %v1025 = vperm.slane %v1023, 0
    %v1026 = vperm.slane %v1023, 1
    %v1027 = vperm.slane %v1023, 2
    %v1028 = vperm.slane %v1023, 3
    %v1029 = vperm.slane %v1023, 4
    %v1030 = vperm.slane %v1023, 5
    %v1031 = vperm.slane %v1023, 6
    %v1032 = vperm.slane %v1023, 7
    %v1297 = vunpack.c.l.b16 %v767
    %v1298 = vunpack.c.h.b16 %v767
    %v1299 = vunpack.c.l.b16 %v768
    %v1300 = vunpack.c.h.b16 %v768
    %v1301 = vunpack.c.l.b16 %v769
    %v1302 = vunpack.c.h.b16 %v769
    %v1303 = vunpack.c.l.b16 %v770
    %v1304 = vunpack.c.h.b16 %v770
    %v1305 = vunpack.c.l.b16 %v771
    %v1306 = vunpack.c.h.b16 %v771
    %v1307 = vunpack.c.l.b16 %v772
    %v1308 = vunpack.c.h.b16 %v772
    %v1309 = vunpack.c.l.b16 %v773
    %v1310 = vunpack.c.h.b16 %v773
    %v1311 = vunpack.c.l.b16 %v774
    %v1312 = vunpack.c.h.b16 %v774
    %v1313 = vunpack.c.l.b16 %v775
    %v1314 = vunpack.c.h.b16 %v775
    %v1315 = vunpack.c.l.b16 %v776
    %v1316 = vunpack.c.h.b16 %v776
    %v1317 = vunpack.c.l.b16 %v777
    %v1318 = vunpack.c.h.b16 %v777
    %v1319 = vunpack.c.l.b16 %v778
    %v1320 = vunpack.c.h.b16 %v778
    %v1321 = vunpack.c.l.b16 %v779
    %v1322 = vunpack.c.h.b16 %v779
    %v1323 = vunpack.c.l.b16 %v780
    %v1324 = vunpack.c.h.b16 %v780
    %v1325 = vunpack.c.l.b16 %v781
    %v1326 = vunpack.c.h.b16 %v781
    %v1327 = vunpack.c.l.b16 %v782
    %v1328 = vunpack.c.h.b16 %v782
    %v1329 = vunpack.c.l.b16 %v783
    %v1330 = vunpack.c.h.b16 %v783
    %v1331 = vunpack.c.l.b16 %v784
    %v1332 = vunpack.c.h.b16 %v784
    %v1333 = vunpack.c.l.b16 %v785
    %v1334 = vunpack.c.h.b16 %v785
    %v1335 = vunpack.c.l.b16 %v786
    %v1336 = vunpack.c.h.b16 %v786
    %v1337 = vunpack.c.l.b16 %v787
    %v1338 = vunpack.c.h.b16 %v787
    %v1339 = vunpack.c.l.b16 %v788
    %v1340 = vunpack.c.h.b16 %v788
    %v1341 = vunpack.c.l.b16 %v789
    %v1342 = vunpack.c.h.b16 %v789
    %v1343 = vunpack.c.l.b16 %v790
    %v1344 = vunpack.c.h.b16 %v790
    %v1345 = vunpack.c.l.b16 %v791
    %v1346 = vunpack.c.h.b16 %v791
    %v1347 = vunpack.c.l.b16 %v792
    %v1348 = vunpack.c.h.b16 %v792
    %v1349 = vunpack.c.l.b16 %v793
    %v1350 = vunpack.c.h.b16 %v793
    %v1351 = vunpack.c.l.b16 %v794
    %v1352 = vunpack.c.h.b16 %v794
    %v1353 = vunpack.c.l.b16 %v795
    %v1354 = vunpack.c.h.b16 %v795
    %v1355 = vunpack.c.l.b16 %v796
    %v1356 = vunpack.c.h.b16 %v796
    %v1357 = vunpack.c.l.b16 %v797
    %v1358 = vunpack.c.h.b16 %v797
    %v1359 = vunpack.c.l.b16 %v798
    %v1360 = vunpack.c.h.b16 %v798
    %v1361 = vunpack.c.l.b16 %v799
    %v1362 = vunpack.c.h.b16 %v799
    %v1363 = vunpack.c.l.b16 %v800
    %v1364 = vunpack.c.h.b16 %v800
    %v1365 = vunpack.c.l.b16 %v801
    %v1366 = vunpack.c.h.b16 %v801
    %v1367 = vunpack.c.l.b16 %v802
    %v1368 = vunpack.c.h.b16 %v802
    %v1369 = vunpack.c.l.b16 %v803
    %v1370 = vunpack.c.h.b16 %v803
    %v1371 = vunpack.c.l.b16 %v804
    %v1372 = vunpack.c.h.b16 %v804
    %v1373 = vunpack.c.l.b16 %v805
    %v1374 = vunpack.c.h.b16 %v805
    %v1375 = vunpack.c.l.b16 %v806
    %v1376 = vunpack.c.h.b16 %v806
    %v1377 = vunpack.c.l.b16 %v807
    %v1378 = vunpack.c.h.b16 %v807
    %v1379 = vunpack.c.l.b16 %v808
    %v1380 = vunpack.c.h.b16 %v808
    %v1381 = vunpack.c.l.b16 %v809
    %v1382 = vunpack.c.h.b16 %v809
    %v1383 = vunpack.c.l.b16 %v810
    %v1384 = vunpack.c.h.b16 %v810
    %v1385 = vunpack.c.l.b16 %v811
    %v1386 = vunpack.c.h.b16 %v811
    %v1387 = vunpack.c.l.b16 %v812
    %v1388 = vunpack.c.h.b16 %v812
    %v1389 = vunpack.c.l.b16 %v813
    %v1390 = vunpack.c.h.b16 %v813
    %v1391 = vunpack.c.l.b16 %v814
    %v1392 = vunpack.c.h.b16 %v814
    %v1393 = vunpack.c.l.b16 %v815
    %v1394 = vunpack.c.h.b16 %v815
    %v1395 = vunpack.c.l.b16 %v816
    %v1396 = vunpack.c.h.b16 %v816
    %v1397 = vunpack.c.l.b16 %v817
    %v1398 = vunpack.c.h.b16 %v817
    %v1399 = vunpack.c.l.b16 %v818
    %v1400 = vunpack.c.h.b16 %v818
    %v1401 = vunpack.c.l.b16 %v819
    %v1402 = vunpack.c.h.b16 %v819
    %v1403 = vunpack.c.l.b16 %v820
    %v1404 = vunpack.c.h.b16 %v820
    %v1405 = vunpack.c.l.b16 %v821
    %v1406 = vunpack.c.h.b16 %v821
    %v1407 = vunpack.c.l.b16 %v822
    %v1408 = vunpack.c.h.b16 %v822
    %v1409 = vunpack.c.l.b16 %v823
    %v1410 = vunpack.c.h.b16 %v823
    %v1411 = vunpack.c.l.b16 %v824
    %v1412 = vunpack.c.h.b16 %v824
    %v1413 = vunpack.c.l.b16 %v825
    %v1414 = vunpack.c.h.b16 %v825
    %v1415 = vunpack.c.l.b16 %v826
    %v1416 = vunpack.c.h.b16 %v826
    %v1417 = vunpack.c.l.b16 %v827
    %v1418 = vunpack.c.h.b16 %v827
    %v1419 = vunpack.c.l.b16 %v828
    %v1420 = vunpack.c.h.b16 %v828
    %v1421 = vunpack.c.l.b16 %v829
    %v1422 = vunpack.c.h.b16 %v829
    %v1423 = vunpack.c.l.b16 %v830
    %v1424 = vunpack.c.h.b16 %v830
    %v1425 = vunpack.c.l.b16 %v831
    %v1426 = vunpack.c.h.b16 %v831
    %v1427 = vunpack.c.l.b16 %v832
    %v1428 = vunpack.c.h.b16 %v832
    %v1429 = vunpack.c.l.b16 %v833
    %v1430 = vunpack.c.h.b16 %v833
    %v1431 = vunpack.c.l.b16 %v834
    %v1432 = vunpack.c.h.b16 %v834
    %v1433 = vunpack.c.l.b16 %v835
    %v1434 = vunpack.c.h.b16 %v835
    %v1435 = vunpack.c.l.b16 %v836
    %v1436 = vunpack.c.h.b16 %v836
    %v1437 = vunpack.c.l.b16 %v837
    %v1438 = vunpack.c.h.b16 %v837
    %v1439 = vunpack.c.l.b16 %v838
    %v1440 = vunpack.c.h.b16 %v838
    %v1441 = vunpack.c.l.b16 %v839
    %v1442 = vunpack.c.h.b16 %v839
    %v1443 = vunpack.c.l.b16 %v840
    %v1444 = vunpack.c.h.b16 %v840
    %v1445 = vunpack.c.l.b16 %v841
    %v1446 = vunpack.c.h.b16 %v841
    %v1447 = vunpack.c.l.b16 %v842
    %v1448 = vunpack.c.h.b16 %v842
    %v1449 = vunpack.c.l.b16 %v843
    %v1450 = vunpack.c.h.b16 %v843
    %v1451 = vunpack.c.l.b16 %v844
    %v1452 = vunpack.c.h.b16 %v844
    %v1453 = vunpack.c.l.b16 %v845
    %v1454 = vunpack.c.h.b16 %v845
    %v1455 = vunpack.c.l.b16 %v846
    %v1456 = vunpack.c.h.b16 %v846
    %v1457 = vunpack.c.l.b16 %v847
    %v1458 = vunpack.c.h.b16 %v847
    %v1459 = vunpack.c.l.b16 %v848
    %v1460 = vunpack.c.h.b16 %v848
    %v1461 = vunpack.c.l.b16 %v849
    %v1462 = vunpack.c.h.b16 %v849
    %v1463 = vunpack.c.l.b16 %v850
    %v1464 = vunpack.c.h.b16 %v850
    %v1465 = vunpack.c.l.b16 %v851
    %v1466 = vunpack.c.h.b16 %v851
    %v1467 = vunpack.c.l.b16 %v852
    %v1468 = vunpack.c.h.b16 %v852
    %v1469 = vunpack.c.l.b16 %v853
    %v1470 = vunpack.c.h.b16 %v853
    %v1471 = vunpack.c.l.b16 %v854
    %v1472 = vunpack.c.h.b16 %v854
    %v1473 = vunpack.c.l.b16 %v855
    %v1474 = vunpack.c.h.b16 %v855
    %v1475 = vunpack.c.l.b16 %v856
    %v1476 = vunpack.c.h.b16 %v856
    %v1477 = vunpack.c.l.b16 %v857
    %v1478 = vunpack.c.h.b16 %v857
    %v1479 = vunpack.c.l.b16 %v858
    %v1480 = vunpack.c.h.b16 %v858
    %v1481 = vunpack.c.l.b16 %v859
    %v1482 = vunpack.c.h.b16 %v859
    %v1483 = vunpack.c.l.b16 %v860
    %v1484 = vunpack.c.h.b16 %v860
    %v1485 = vunpack.c.l.b16 %v861
    %v1486 = vunpack.c.h.b16 %v861
    %v1487 = vunpack.c.l.b16 %v862
    %v1488 = vunpack.c.h.b16 %v862
    %v1489 = vunpack.c.l.b16 %v863
    %v1490 = vunpack.c.h.b16 %v863
    %v1491 = vunpack.c.l.b16 %v864
    %v1492 = vunpack.c.h.b16 %v864
    %v1493 = vunpack.c.l.b16 %v865
    %v1494 = vunpack.c.h.b16 %v865
    %v1495 = vunpack.c.l.b16 %v866
    %v1496 = vunpack.c.h.b16 %v866
    %v1497 = vunpack.c.l.b16 %v867
    %v1498 = vunpack.c.h.b16 %v867
    %v1499 = vunpack.c.l.b16 %v868
    %v1500 = vunpack.c.h.b16 %v868
    %v1501 = vunpack.c.l.b16 %v869
    %v1502 = vunpack.c.h.b16 %v869
    %v1503 = vunpack.c.l.b16 %v870
    %v1504 = vunpack.c.h.b16 %v870
    %v1505 = vunpack.c.l.b16 %v871
    %v1506 = vunpack.c.h.b16 %v871
    %v1507 = vunpack.c.l.b16 %v872
    %v1508 = vunpack.c.h.b16 %v872
    %v1509 = vunpack.c.l.b16 %v873
    %v1510 = vunpack.c.h.b16 %v873
    %v1511 = vunpack.c.l.b16 %v874
    %v1512 = vunpack.c.h.b16 %v874
    %v1513 = vunpack.c.l.b16 %v875
    %v1514 = vunpack.c.h.b16 %v875
    %v1515 = vunpack.c.l.b16 %v876
    %v1516 = vunpack.c.h.b16 %v876
    %v1517 = vunpack.c.l.b16 %v877
    %v1518 = vunpack.c.h.b16 %v877
    %v1519 = vunpack.c.l.b16 %v878
    %v1520 = vunpack.c.h.b16 %v878
    %v1521 = vunpack.c.l.b16 %v879
    %v1522 = vunpack.c.h.b16 %v879
    %v1523 = vunpack.c.l.b16 %v880
    %v1524 = vunpack.c.h.b16 %v880
    %v1525 = vunpack.c.l.b16 %v881
    %v1526 = vunpack.c.h.b16 %v881
    %v1527 = vunpack.c.l.b16 %v882
    %v1528 = vunpack.c.h.b16 %v882
    %v1529 = vunpack.c.l.b16 %v883
    %v1530 = vunpack.c.h.b16 %v883
    %v1531 = vunpack.c.l.b16 %v884
    %v1532 = vunpack.c.h.b16 %v884
    %v1533 = vunpack.c.l.b16 %v885
    %v1534 = vunpack.c.h.b16 %v885
    %v1535 = vunpack.c.l.b16 %v886
    %v1536 = vunpack.c.h.b16 %v886
    %v1537 = vunpack.c.l.b16 %v887
    %v1538 = vunpack.c.h.b16 %v887
    %v1539 = vunpack.c.l.b16 %v888
    %v1540 = vunpack.c.h.b16 %v888
    %v1541 = vunpack.c.l.b16 %v889
    %v1542 = vunpack.c.h.b16 %v889
    %v1543 = vunpack.c.l.b16 %v890
    %v1544 = vunpack.c.h.b16 %v890
    %v1545 = vunpack.c.l.b16 %v891
    %v1546 = vunpack.c.h.b16 %v891
    %v1547 = vunpack.c.l.b16 %v892
    %v1548 = vunpack.c.h.b16 %v892
    %v1549 = vunpack.c.l.b16 %v893
    %v1550 = vunpack.c.h.b16 %v893
    %v1551 = vunpack.c.l.b16 %v894
    %v1552 = vunpack.c.h.b16 %v894
    %v1553 = vunpack.c.l.b16 %v895
    %v1554 = vunpack.c.h.b16 %v895
    %v1555 = vunpack.c.l.b16 %v896
    %v1556 = vunpack.c.h.b16 %v896
    %v1557 = vunpack.c.l.b16 %v897
    %v1558 = vunpack.c.h.b16 %v897
    %v1559 = vunpack.c.l.b16 %v898
    %v1560 = vunpack.c.h.b16 %v898
    %v1561 = vunpack.c.l.b16 %v899
    %v1562 = vunpack.c.h.b16 %v899
    %v1563 = vunpack.c.l.b16 %v900
    %v1564 = vunpack.c.h.b16 %v900
    %v1565 = vunpack.c.l.b16 %v901
    %v1566 = vunpack.c.h.b16 %v901
    %v1567 = vunpack.c.l.b16 %v902
    %v1568 = vunpack.c.h.b16 %v902
    %v1569 = vunpack.c.l.b16 %v903
    %v1570 = vunpack.c.h.b16 %v903
    %v1571 = vunpack.c.l.b16 %v904
    %v1572 = vunpack.c.h.b16 %v904
    %v1573 = vunpack.c.l.b16 %v905
    %v1574 = vunpack.c.h.b16 %v905
    %v1575 = vunpack.c.l.b16 %v906
    %v1576 = vunpack.c.h.b16 %v906
    %v1577 = vunpack.c.l.b16 %v907
    %v1578 = vunpack.c.h.b16 %v907
    %v1579 = vunpack.c.l.b16 %v908
    %v1580 = vunpack.c.h.b16 %v908
    %v1581 = vunpack.c.l.b16 %v909
    %v1582 = vunpack.c.h.b16 %v909
    %v1583 = vunpack.c.l.b16 %v910
    %v1584 = vunpack.c.h.b16 %v910
    %v1585 = vunpack.c.l.b16 %v911
    %v1586 = vunpack.c.h.b16 %v911
    %v1587 = vunpack.c.l.b16 %v912
    %v1588 = vunpack.c.h.b16 %v912
    %v1589 = vunpack.c.l.b16 %v913
    %v1590 = vunpack.c.h.b16 %v913
    %v1591 = vunpack.c.l.b16 %v914
    %v1592 = vunpack.c.h.b16 %v914
    %v1593 = vunpack.c.l.b16 %v915
    %v1594 = vunpack.c.h.b16 %v915
    %v1595 = vunpack.c.l.b16 %v916
    %v1596 = vunpack.c.h.b16 %v916
    %v1597 = vunpack.c.l.b16 %v917
    %v1598 = vunpack.c.h.b16 %v917
    %v1599 = vunpack.c.l.b16 %v918
    %v1600 = vunpack.c.h.b16 %v918
    %v1601 = vunpack.c.l.b16 %v919
    %v1602 = vunpack.c.h.b16 %v919
    %v1603 = vunpack.c.l.b16 %v920
    %v1604 = vunpack.c.h.b16 %v920
    %v1605 = vunpack.c.l.b16 %v921
    %v1606 = vunpack.c.h.b16 %v921
    %v1607 = vunpack.c.l.b16 %v922
    %v1608 = vunpack.c.h.b16 %v922
    %v1609 = vunpack.c.l.b16 %v923
    %v1610 = vunpack.c.h.b16 %v923
    %v1611 = vunpack.c.l.b16 %v924
    %v1612 = vunpack.c.h.b16 %v924
    %v1613 = vunpack.c.l.b16 %v925
    %v1614 = vunpack.c.h.b16 %v925
    %v1615 = vunpack.c.l.b16 %v926
    %v1616 = vunpack.c.h.b16 %v926
    %v1617 = vunpack.c.l.b16 %v927
    %v1618 = vunpack.c.h.b16 %v927
    %v1619 = vunpack.c.l.b16 %v928
    %v1620 = vunpack.c.h.b16 %v928
    %v1621 = vunpack.c.l.b16 %v929
    %v1622 = vunpack.c.h.b16 %v929
    %v1623 = vunpack.c.l.b16 %v930
    %v1624 = vunpack.c.h.b16 %v930
    %v1625 = vunpack.c.l.b16 %v931
    %v1626 = vunpack.c.h.b16 %v931
    %v1627 = vunpack.c.l.b16 %v932
    %v1628 = vunpack.c.h.b16 %v932
    %v1629 = vunpack.c.l.b16 %v933
    %v1630 = vunpack.c.h.b16 %v933
    %v1631 = vunpack.c.l.b16 %v934
    %v1632 = vunpack.c.h.b16 %v934
    %v1633 = vunpack.c.l.b16 %v935
    %v1634 = vunpack.c.h.b16 %v935
    %v1635 = vunpack.c.l.b16 %v936
    %v1636 = vunpack.c.h.b16 %v936
    %v1637 = vunpack.c.l.b16 %v937
    %v1638 = vunpack.c.h.b16 %v937
    %v1639 = vunpack.c.l.b16 %v938
    %v1640 = vunpack.c.h.b16 %v938
    %v1641 = vunpack.c.l.b16 %v939
    %v1642 = vunpack.c.h.b16 %v939
    %v1643 = vunpack.c.l.b16 %v940
    %v1644 = vunpack.c.h.b16 %v940
    %v1645 = vunpack.c.l.b16 %v941
    %v1646 = vunpack.c.h.b16 %v941
    %v1647 = vunpack.c.l.b16 %v942
    %v1648 = vunpack.c.h.b16 %v942
    %v1649 = vunpack.c.l.b16 %v943
    %v1650 = vunpack.c.h.b16 %v943
    %v1651 = vunpack.c.l.b16 %v944
    %v1652 = vunpack.c.h.b16 %v944
    %v1653 = vunpack.c.l.b16 %v945
    %v1654 = vunpack.c.h.b16 %v945
    %v1655 = vunpack.c.l.b16 %v946
    %v1656 = vunpack.c.h.b16 %v946
    %v1657 = vunpack.c.l.b16 %v947
    %v1658 = vunpack.c.h.b16 %v947
    %v1659 = vunpack.c.l.b16 %v948
    %v1660 = vunpack.c.h.b16 %v948
    %v1661 = vunpack.c.l.b16 %v949
    %v1662 = vunpack.c.h.b16 %v949
    %v1663 = vunpack.c.l.b16 %v950
    %v1664 = vunpack.c.h.b16 %v950
    %v1665 = vunpack.c.l.b16 %v951
    %v1666 = vunpack.c.h.b16 %v951
    %v1667 = vunpack.c.l.b16 %v952
    %v1668 = vunpack.c.h.b16 %v952
    %v1669 = vunpack.c.l.b16 %v953
    %v1670 = vunpack.c.h.b16 %v953
    %v1671 = vunpack.c.l.b16 %v954
    %v1672 = vunpack.c.h.b16 %v954
    %v1673 = vunpack.c.l.b16 %v955
    %v1674 = vunpack.c.h.b16 %v955
    %v1675 = vunpack.c.l.b16 %v956
    %v1676 = vunpack.c.h.b16 %v956
    %v1677 = vunpack.c.l.b16 %v957
    %v1678 = vunpack.c.h.b16 %v957
    %v1679 = vunpack.c.l.b16 %v958
    %v1680 = vunpack.c.h.b16 %v958
    %v1681 = vunpack.c.l.b16 %v959
    %v1682 = vunpack.c.h.b16 %v959
    %v1683 = vunpack.c.l.b16 %v960
    %v1684 = vunpack.c.h.b16 %v960
    %v1685 = vunpack.c.l.b16 %v961
    %v1686 = vunpack.c.h.b16 %v961
    %v1687 = vunpack.c.l.b16 %v962
    %v1688 = vunpack.c.h.b16 %v962
    %v1689 = vunpack.c.l.b16 %v963
    %v1690 = vunpack.c.h.b16 %v963
    %v1691 = vunpack.c.l.b16 %v964
    %v1692 = vunpack.c.h.b16 %v964
    %v1693 = vunpack.c.l.b16 %v965
    %v1694 = vunpack.c.h.b16 %v965
    %v1695 = vunpack.c.l.b16 %v966
    %v1696 = vunpack.c.h.b16 %v966
    %v1697 = vunpack.c.l.b16 %v967
    %v1698 = vunpack.c.h.b16 %v967
    %v1699 = vunpack.c.l.b16 %v968
    %v1700 = vunpack.c.h.b16 %v968
    %v1701 = vunpack.c.l.b16 %v969
    %v1702 = vunpack.c.h.b16 %v969
    %v1703 = vunpack.c.l.b16 %v970
    %v1704 = vunpack.c.h.b16 %v970
    %v1705 = vunpack.c.l.b16 %v971
    %v1706 = vunpack.c.h.b16 %v971
    %v1707 = vunpack.c.l.b16 %v972
    %v1708 = vunpack.c.h.b16 %v972
    %v1709 = vunpack.c.l.b16 %v973
    %v1710 = vunpack.c.h.b16 %v973
    %v1711 = vunpack.c.l.b16 %v974
    %v1712 = vunpack.c.h.b16 %v974
    %v1713 = vunpack.c.l.b16 %v975
    %v1714 = vunpack.c.h.b16 %v975
    %v1715 = vunpack.c.l.b16 %v976
    %v1716 = vunpack.c.h.b16 %v976
    %v1717 = vunpack.c.l.b16 %v977
    %v1718 = vunpack.c.h.b16 %v977
    %v1719 = vunpack.c.l.b16 %v978
    %v1720 = vunpack.c.h.b16 %v978
    %v1721 = vunpack.c.l.b16 %v979
    %v1722 = vunpack.c.h.b16 %v979
    %v1723 = vunpack.c.l.b16 %v980
    %v1724 = vunpack.c.h.b16 %v980
    %v1725 = vunpack.c.l.b16 %v981
    %v1726 = vunpack.c.h.b16 %v981
    %v1727 = vunpack.c.l.b16 %v982
    %v1728 = vunpack.c.h.b16 %v982
    %v1729 = vunpack.c.l.b16 %v983
    %v1730 = vunpack.c.h.b16 %v983
    %v1731 = vunpack.c.l.b16 %v984
    %v1732 = vunpack.c.h.b16 %v984
    %v1733 = vunpack.c.l.b16 %v985
    %v1734 = vunpack.c.h.b16 %v985
    %v1735 = vunpack.c.l.b16 %v986
    %v1736 = vunpack.c.h.b16 %v986
    %v1737 = vunpack.c.l.b16 %v987
    %v1738 = vunpack.c.h.b16 %v987
    %v1739 = vunpack.c.l.b16 %v988
    %v1740 = vunpack.c.h.b16 %v988
    %v1741 = vunpack.c.l.b16 %v989
    %v1742 = vunpack.c.h.b16 %v989
    %v1743 = vunpack.c.l.b16 %v990
    %v1744 = vunpack.c.h.b16 %v990
    %v1745 = vunpack.c.l.b16 %v991
    %v1746 = vunpack.c.h.b16 %v991
    %v1747 = vunpack.c.l.b16 %v992
    %v1748 = vunpack.c.h.b16 %v992
    %v1749 = vunpack.c.l.b16 %v993
    %v1750 = vunpack.c.h.b16 %v993
    %v1751 = vunpack.c.l.b16 %v994
    %v1752 = vunpack.c.h.b16 %v994
    %v1753 = vunpack.c.l.b16 %v995
    %v1754 = vunpack.c.h.b16 %v995
    %v1755 = vunpack.c.l.b16 %v996
    %v1756 = vunpack.c.h.b16 %v996
    %v1757 = vunpack.c.l.b16 %v997
    %v1758 = vunpack.c.h.b16 %v997
    %v1759 = vunpack.c.l.b16 %v998
    %v1760 = vunpack.c.h.b16 %v998
    %v1761 = vunpack.c.l.b16 %v999
    %v1762 = vunpack.c.h.b16 %v999
    %v1763 = vunpack.c.l.b16 %v1000
    %v1764 = vunpack.c.h.b16 %v1000
    %v1765 = vunpack.c.l.b16 %v1001
    %v1766 = vunpack.c.h.b16 %v1001
    %v1767 = vunpack.c.l.b16 %v1002
    %v1768 = vunpack.c.h.b16 %v1002
    %v1769 = vunpack.c.l.b16 %v1003
    %v1770 = vunpack.c.h.b16 %v1003
    %v1771 = vunpack.c.l.b16 %v1004
    %v1772 = vunpack.c.h.b16 %v1004
    %v1773 = vunpack.c.l.b16 %v1005
    %v1774 = vunpack.c.h.b16 %v1005
    %v1775 = vunpack.c.l.b16 %v1006
    %v1776 = vunpack.c.h.b16 %v1006
    %v1777 = vunpack.c.l.b16 %v1007
    %v1778 = vunpack.c.h.b16 %v1007
    %v1779 = vunpack.c.l.b16 %v1008
    %v1780 = vunpack.c.h.b16 %v1008
    %v1781 = vunpack.c.l.b16 %v1009
    %v1782 = vunpack.c.h.b16 %v1009
    %v1783 = vunpack.c.l.b16 %v1010
    %v1784 = vunpack.c.h.b16 %v1010
    %v1785 = vunpack.c.l.b16 %v1011
    %v1786 = vunpack.c.h.b16 %v1011
    %v1787 = vunpack.c.l.b16 %v1012
    %v1788 = vunpack.c.h.b16 %v1012
    %v1789 = vunpack.c.l.b16 %v1013
    %v1790 = vunpack.c.h.b16 %v1013
    %v1791 = vunpack.c.l.b16 %v1014
    %v1792 = vunpack.c.h.b16 %v1014
    %v1793 = vunpack.c.l.b16 %v1015
    %v1794 = vunpack.c.h.b16 %v1015
    %v1795 = vunpack.c.l.b16 %v1016
    %v1796 = vunpack.c.h.b16 %v1016
    %v1797 = vunpack.c.l.b16 %v1017
    %v1798 = vunpack.c.h.b16 %v1017
    %v1799 = vunpack.c.l.b16 %v1018
    %v1800 = vunpack.c.h.b16 %v1018
    %v1801 = vunpack.c.l.b16 %v1019
    %v1802 = vunpack.c.h.b16 %v1019
    %v1803 = vunpack.c.l.b16 %v1020
    %v1804 = vunpack.c.h.b16 %v1020
    %v1805 = vunpack.c.l.b16 %v1021
    %v1806 = vunpack.c.h.b16 %v1021
    %v1807 = vunpack.c.l.b16 %v1022
    %v1808 = vunpack.c.h.b16 %v1022
    %v1809 = vpack.c.b16 %v1305, %v1297
    %v1810 = vpack.c.b16 %v1306, %v1298
    %v1811 = vpack.c.b16 %v1307, %v1299
    %v1812 = vpack.c.b16 %v1308, %v1300
    %v1813 = vpack.c.b16 %v1309, %v1301
    %v1814 = vpack.c.b16 %v1310, %v1302
    %v1815 = vpack.c.b16 %v1311, %v1303
    %v1816 = vpack.c.b16 %v1312, %v1304
    %v1817 = vpack.c.b16 %v1321, %v1313
    %v1818 = vpack.c.b16 %v1322, %v1314
    %v1819 = vpack.c.b16 %v1323, %v1315
    %v1820 = vpack.c.b16 %v1324, %v1316
    %v1821 = vpack.c.b16 %v1325, %v1317
    %v1822 = vpack.c.b16 %v1326, %v1318
    %v1823 = vpack.c.b16 %v1327, %v1319
    %v1824 = vpack.c.b16 %v1328, %v1320
    %v1825 = vpack.c.b16 %v1337, %v1329
    %v1826 = vpack.c.b16 %v1338, %v1330
    %v1827 = vpack.c.b16 %v1339, %v1331
    %v1828 = vpack.c.b16 %v1340, %v1332
    %v1829 = vpack.c.b16 %v1341, %v1333
    %v1830 = vpack.c.b16 %v1342, %v1334
    %v1831 = vpack.c.b16 %v1343, %v1335
    %v1832 = vpack.c.b16 %v1344, %v1336
    %v1833 = vpack.c.b16 %v1353, %v1345
    %v1834 = vpack.c.b16 %v1354, %v1346
    %v1835 = vpack.c.b16 %v1355, %v1347
    %v1836 = vpack.c.b16 %v1356, %v1348
    %v1837 = vpack.c.b16 %v1357, %v1349
    %v1838 = vpack.c.b16 %v1358, %v1350
    %v1839 = vpack.c.b16 %v1359, %v1351
    %v1840 = vpack.c.b16 %v1360, %v1352
    %v1841 = vpack.c.b16 %v1369, %v1361
    %v1842 = vpack.c.b16 %v1370, %v1362
    %v1843 = vpack.c.b16 %v1371, %v1363
    %v1844 = vpack.c.b16 %v1372, %v1364
    %v1845 = vpack.c.b16 %v1373, %v1365
    %v1846 = vpack.c.b16 %v1374, %v1366
    %v1847 = vpack.c.b16 %v1375, %v1367
    %v1848 = vpack.c.b16 %v1376, %v1368
    %v1849 = vpack.c.b16 %v1385, %v1377
    %v1850 = vpack.c.b16 %v1386, %v1378
    %v1851 = vpack.c.b16 %v1387, %v1379
    %v1852 = vpack.c.b16 %v1388, %v1380
    %v1853 = vpack.c.b16 %v1389, %v1381
    %v1854 = vpack.c.b16 %v1390, %v1382
    %v1855 = vpack.c.b16 %v1391, %v1383
    %v1856 = vpack.c.b16 %v1392, %v1384
    %v1857 = vpack.c.b16 %v1401, %v1393
    %v1858 = vpack.c.b16 %v1402, %v1394
    %v1859 = vpack.c.b16 %v1403, %v1395
    %v1860 = vpack.c.b16 %v1404, %v1396
    %v1861 = vpack.c.b16 %v1405, %v1397
    %v1862 = vpack.c.b16 %v1406, %v1398
    %v1863 = vpack.c.b16 %v1407, %v1399
    %v1864 = vpack.c.b16 %v1408, %v1400
    %v1865 = vpack.c.b16 %v1417, %v1409
    %v1866 = vpack.c.b16 %v1418, %v1410
    %v1867 = vpack.c.b16 %v1419, %v1411
    %v1868 = vpack.c.b16 %v1420, %v1412
    %v1869 = vpack.c.b16 %v1421, %v1413
    %v1870 = vpack.c.b16 %v1422, %v1414
    %v1871 = vpack.c.b16 %v1423, %v1415
    %v1872 = vpack.c.b16 %v1424, %v1416
    %v1873 = vpack.c.b16 %v1433, %v1425
    %v1874 = vpack.c.b16 %v1434, %v1426
    %v1875 = vpack.c.b16 %v1435, %v1427
    %v1876 = vpack.c.b16 %v1436, %v1428
    %v1877 = vpack.c.b16 %v1437, %v1429
    %v1878 = vpack.c.b16 %v1438, %v1430
    %v1879 = vpack.c.b16 %v1439, %v1431
    %v1880 = vpack.c.b16 %v1440, %v1432
    %v1881 = vpack.c.b16 %v1449, %v1441
    %v1882 = vpack.c.b16 %v1450, %v1442
    %v1883 = vpack.c.b16 %v1451, %v1443
    %v1884 = vpack.c.b16 %v1452, %v1444
    %v1885 = vpack.c.b16 %v1453, %v1445
    %v1886 = vpack.c.b16 %v1454, %v1446
    %v1887 = vpack.c.b16 %v1455, %v1447
    %v1888 = vpack.c.b16 %v1456, %v1448
    %v1889 = vpack.c.b16 %v1465, %v1457
    %v1890 = vpack.c.b16 %v1466, %v1458
    %v1891 = vpack.c.b16 %v1467, %v1459
    %v1892 = vpack.c.b16 %v1468, %v1460
    %v1893 = vpack.c.b16 %v1469, %v1461
    %v1894 = vpack.c.b16 %v1470, %v1462
    %v1895 = vpack.c.b16 %v1471, %v1463
    %v1896 = vpack.c.b16 %v1472, %v1464
    %v1897 = vpack.c.b16 %v1481, %v1473
    %v1898 = vpack.c.b16 %v1482, %v1474
    %v1899 = vpack.c.b16 %v1483, %v1475
    %v1900 = vpack.c.b16 %v1484, %v1476
    %v1901 = vpack.c.b16 %v1485, %v1477
    %v1902 = vpack.c.b16 %v1486, %v1478
    %v1903 = vpack.c.b16 %v1487, %v1479
    %v1904 = vpack.c.b16 %v1488, %v1480
    %v1905 = vpack.c.b16 %v1497, %v1489
    %v1906 = vpack.c.b16 %v1498, %v1490
    %v1907 = vpack.c.b16 %v1499, %v1491
    %v1908 = vpack.c.b16 %v1500, %v1492
    %v1909 = vpack.c.b16 %v1501, %v1493
    %v1910 = vpack.c.b16 %v1502, %v1494
    %v1911 = vpack.c.b16 %v1503, %v1495
    %v1912 = vpack.c.b16 %v1504, %v1496
    %v1913 = vpack.c.b16 %v1513, %v1505
    %v1914 = vpack.c.b16 %v1514, %v1506
    %v1915 = vpack.c.b16 %v1515, %v1507
    %v1916 = vpack.c.b16 %v1516, %v1508
    %v1917 = vpack.c.b16 %v1517, %v1509
    %v1918 = vpack.c.b16 %v1518, %v1510
    %v1919 = vpack.c.b16 %v1519, %v1511
    %v1920 = vpack.c.b16 %v1520, %v1512
    %v1921 = vpack.c.b16 %v1529, %v1521
    %v1922 = vpack.c.b16 %v1530, %v1522
    %v1923 = vpack.c.b16 %v1531, %v1523
    %v1924 = vpack.c.b16 %v1532, %v1524
    %v1925 = vpack.c.b16 %v1533, %v1525
    %v1926 = vpack.c.b16 %v1534, %v1526
    %v1927 = vpack.c.b16 %v1535, %v1527
    %v1928 = vpack.c.b16 %v1536, %v1528
    %v1929 = vpack.c.b16 %v1545, %v1537
    %v1930 = vpack.c.b16 %v1546, %v1538
    %v1931 = vpack.c.b16 %v1547, %v1539
    %v1932 = vpack.c.b16 %v1548, %v1540
    %v1933 = vpack.c.b16 %v1549, %v1541
    %v1934 = vpack.c.b16 %v1550, %v1542
    %v1935 = vpack.c.b16 %v1551, %v1543
    %v1936 = vpack.c.b16 %v1552, %v1544
    %v1937 = vpack.c.b16 %v1561, %v1553
    %v1938 = vpack.c.b16 %v1562, %v1554
    %v1939 = vpack.c.b16 %v1563, %v1555
    %v1940 = vpack.c.b16 %v1564, %v1556
    %v1941 = vpack.c.b16 %v1565, %v1557
    %v1942 = vpack.c.b16 %v1566, %v1558
    %v1943 = vpack.c.b16 %v1567, %v1559
    %v1944 = vpack.c.b16 %v1568, %v1560
    %v1945 = vpack.c.b16 %v1577, %v1569
    %v1946 = vpack.c.b16 %v1578, %v1570
    %v1947 = vpack.c.b16 %v1579, %v1571
    %v1948 = vpack.c.b16 %v1580, %v1572
    %v1949 = vpack.c.b16 %v1581, %v1573
    %v1950 = vpack.c.b16 %v1582, %v1574
    %v1951 = vpack.c.b16 %v1583, %v1575
    %v1952 = vpack.c.b16 %v1584, %v1576
    %v1953 = vpack.c.b16 %v1593, %v1585
    %v1954 = vpack.c.b16 %v1594, %v1586
    %v1955 = vpack.c.b16 %v1595, %v1587
    %v1956 = vpack.c.b16 %v1596, %v1588
    %v1957 = vpack.c.b16 %v1597, %v1589
    %v1958 = vpack.c.b16 %v1598, %v1590
    %v1959 = vpack.c.b16 %v1599, %v1591
    %v1960 = vpack.c.b16 %v1600, %v1592
    %v1961 = vpack.c.b16 %v1609, %v1601
    %v1962 = vpack.c.b16 %v1610, %v1602
    %v1963 = vpack.c.b16 %v1611, %v1603
    %v1964 = vpack.c.b16 %v1612, %v1604
    %v1965 = vpack.c.b16 %v1613, %v1605
    %v1966 = vpack.c.b16 %v1614, %v1606
    %v1967 = vpack.c.b16 %v1615, %v1607
    %v1968 = vpack.c.b16 %v1616, %v1608
    %v1969 = vpack.c.b16 %v1625, %v1617
    %v1970 = vpack.c.b16 %v1626, %v1618
    %v1971 = vpack.c.b16 %v1627, %v1619
    %v1972 = vpack.c.b16 %v1628, %v1620
    %v1973 = vpack.c.b16 %v1629, %v1621
    %v1974 = vpack.c.b16 %v1630, %v1622
    %v1975 = vpack.c.b16 %v1631, %v1623
    %v1976 = vpack.c.b16 %v1632, %v1624
    %v1977 = vpack.c.b16 %v1641, %v1633
    %v1978 = vpack.c.b16 %v1642, %v1634
    %v1979 = vpack.c.b16 %v1643, %v1635
    %v1980 = vpack.c.b16 %v1644, %v1636
    %v1981 = vpack.c.b16 %v1645, %v1637
    %v1982 = vpack.c.b16 %v1646, %v1638
    %v1983 = vpack.c.b16 %v1647, %v1639
    %v1984 = vpack.c.b16 %v1648, %v1640
    %v1985 = vpack.c.b16 %v1657, %v1649
    %v1986 = vpack.c.b16 %v1658, %v1650
    %v1987 = vpack.c.b16 %v1659, %v1651
    %v1988 = vpack.c.b16 %v1660, %v1652
    %v1989 = vpack.c.b16 %v1661, %v1653
    %v1990 = vpack.c.b16 %v1662, %v1654
    %v1991 = vpack.c.b16 %v1663, %v1655
    %v1992 = vpack.c.b16 %v1664, %v1656
    %v1993 = vpack.c.b16 %v1673, %v1665
    %v1994 = vpack.c.b16 %v1674, %v1666
    %v1995 = vpack.c.b16 %v1675, %v1667
    %v1996 = vpack.c.b16 %v1676, %v1668
    %v1997 = vpack.c.b16 %v1677, %v1669
    %v1998 = vpack.c.b16 %v1678, %v1670
    %v1999 = vpack.c.b16 %v1679, %v1671
    %v2000 = vpack.c.b16 %v1680, %v1672
    %v2001 = vpack.c.b16 %v1689, %v1681
    %v2002 = vpack.c.b16 %v1690, %v1682
    %v2003 = vpack.c.b16 %v1691, %v1683
    %v2004 = vpack.c.b16 %v1692, %v1684
    %v2005 = vpack.c.b16 %v1693, %v1685
    %v2006 = vpack.c.b16 %v1694, %v1686
    %v2007 = vpack.c.b16 %v1695, %v1687
    %v2008 = vpack.c.b16 %v1696, %v1688
    %v2009 = vpack.c.b16 %v1705, %v1697
    %v2010 = vpack.c.b16 %v1706, %v1698
    %v2011 = vpack.c.b16 %v1707, %v1699
    %v2012 = vpack.c.b16 %v1708, %v1700
    %v2013 = vpack.c.b16 %v1709, %v1701
    %v2014 = vpack.c.b16 %v1710, %v1702
    %v2015 = vpack.c.b16 %v1711, %v1703
    %v2016 = vpack.c.b16 %v1712, %v1704
    %v2017 = vpack.c.b16 %v1721, %v1713
    %v2018 = vpack.c.b16 %v1722, %v1714
    %v2019 = vpack.c.b16 %v1723, %v1715
    %v2020 = vpack.c.b16 %v1724, %v1716
    %v2021 = vpack.c.b16 %v1725, %v1717
    %v2022 = vpack.c.b16 %v1726, %v1718
    %v2023 = vpack.c.b16 %v1727, %v1719
    %v2024 = vpack.c.b16 %v1728, %v1720
    %v2025 = vpack.c.b16 %v1737, %v1729
    %v2026 = vpack.c.b16 %v1738, %v1730
    %v2027 = vpack.c.b16 %v1739, %v1731
    %v2028 = vpack.c.b16 %v1740, %v1732
    %v2029 = vpack.c.b16 %v1741, %v1733
    %v2030 = vpack.c.b16 %v1742, %v1734
    %v2031 = vpack.c.b16 %v1743, %v1735
    %v2032 = vpack.c.b16 %v1744, %v1736
    %v2033 = vpack.c.b16 %v1753, %v1745
    %v2034 = vpack.c.b16 %v1754, %v1746
    %v2035 = vpack.c.b16 %v1755, %v1747
    %v2036 = vpack.c.b16 %v1756, %v1748
    %v2037 = vpack.c.b16 %v1757, %v1749
    %v2038 = vpack.c.b16 %v1758, %v1750
    %v2039 = vpack.c.b16 %v1759, %v1751
    %v2040 = vpack.c.b16 %v1760, %v1752
    %v2041 = vpack.c.b16 %v1769, %v1761
    %v2042 = vpack.c.b16 %v1770, %v1762
    %v2043 = vpack.c.b16 %v1771, %v1763
    %v2044 = vpack.c.b16 %v1772, %v1764
    %v2045 = vpack.c.b16 %v1773, %v1765
    %v2046 = vpack.c.b16 %v1774, %v1766
    %v2047 = vpack.c.b16 %v1775, %v1767
    %v2048 = vpack.c.b16 %v1776, %v1768
    %v2049 = vpack.c.b16 %v1785, %v1777
    %v2050 = vpack.c.b16 %v1786, %v1778
    %v2051 = vpack.c.b16 %v1787, %v1779
    %v2052 = vpack.c.b16 %v1788, %v1780
    %v2053 = vpack.c.b16 %v1789, %v1781
    %v2054 = vpack.c.b16 %v1790, %v1782
    %v2055 = vpack.c.b16 %v1791, %v1783
    %v2056 = vpack.c.b16 %v1792, %v1784
    %v2057 = vpack.c.b16 %v1801, %v1793
    %v2058 = vpack.c.b16 %v1802, %v1794
    %v2059 = vpack.c.b16 %v1803, %v1795
    %v2060 = vpack.c.b16 %v1804, %v1796
    %v2061 = vpack.c.b16 %v1805, %v1797
    %v2062 = vpack.c.b16 %v1806, %v1798
    %v2063 = vpack.c.b16 %v1807, %v1799
    %v2064 = vpack.c.b16 %v1808, %v1800
    %2321 = vmatpush.bf16.msra.mxu0 %v1865
    %2322 = vmatpush.bf16.msra.mxu0 %v1857
    %2323 = vmatpush.bf16.msra.mxu0 %v1849
    %2324 = vmatpush.bf16.msra.mxu0 %v1841
    %2325 = vmatpush.bf16.msra.mxu0 %v1833
    %2326 = vmatpush.bf16.msra.mxu0 %v1825
    %2327 = vmatpush.bf16.msra.mxu0 %v1817
    %2328 = vmatpush.bf16.msra.mxu0 %v1809
    %2329 = vmatmul.bf16.gmra.mxu0 %v763
    %v2330 = vpop.f32.mrf.mxu0
    %v2331 = vadd.f32 %v1025, %v2330
    %v2332 = vpop.f32.mrf.mxu0
    %2333 = vdwg.mxu0
    %2334 = vmatpush.bf16.msra.mxu0 %v1929
    %2335 = vmatpush.bf16.msra.mxu0 %v1921
    %2336 = vmatpush.bf16.msra.mxu0 %v1913
    %2337 = vmatpush.bf16.msra.mxu0 %v1905
    %2338 = vmatpush.bf16.msra.mxu0 %v1897
    %2339 = vmatpush.bf16.msra.mxu0 %v1889
    %2340 = vmatpush.bf16.msra.mxu0 %v1881
    %2341 = vmatpush.bf16.msra.mxu0 %v1873
    %2342 = vmatmul.bf16.gmra.mxu0 %v764
    %v2343 = vpop.f32.mrf.mxu0
    %v2344 = vadd.f32 %v2331, %v2343
    %v2345 = vpop.f32.mrf.mxu0
    %2346 = vdwg.mxu0
    %2347 = vmatpush.bf16.msra.mxu0 %v1993
    %2348 = vmatpush.bf16.msra.mxu0 %v1985
    %2349 = vmatpush.bf16.msra.mxu0 %v1977
    %2350 = vmatpush.bf16.msra.mxu0 %v1969
    %2351 = vmatpush.bf16.msra.mxu0 %v1961
    %2352 = vmatpush.bf16.msra.mxu0 %v1953
    %2353 = vmatpush.bf16.msra.mxu0 %v1945
    %2354 = vmatpush.bf16.msra.mxu0 %v1937
    %2355 = vmatmul.bf16.gmra.mxu0 %v765
    %v2356 = vpop.f32.mrf.mxu0
    %v2357 = vadd.f32 %v2344, %v2356
    %v2358 = vpop.f32.mrf.mxu0
    %2359 = vdwg.mxu0
    %2360 = vmatpush.bf16.msra.mxu0 %v2057
    %2361 = vmatpush.bf16.msra.mxu0 %v2049
    %2362 = vmatpush.bf16.msra.mxu0 %v2041
    %2363 = vmatpush.bf16.msra.mxu0 %v2033
    %2364 = vmatpush.bf16.msra.mxu0 %v2025
    %2365 = vmatpush.bf16.msra.mxu0 %v2017
    %2366 = vmatpush.bf16.msra.mxu0 %v2009
    %2367 = vmatpush.bf16.msra.mxu0 %v2001
    %2368 = vmatmul.bf16.gmra.mxu0 %v766
    %v2369 = vpop.f32.mrf.mxu0
    %v2370 = vadd.f32 %v2357, %v2369
    %v2371 = vpop.f32.mrf.mxu0
    %2372 = vdwg.mxu0
    %2373 = vmatpush.bf16.msra.mxu0 %v1866
    %2374 = vmatpush.bf16.msra.mxu0 %v1858
    %2375 = vmatpush.bf16.msra.mxu0 %v1850
    %2376 = vmatpush.bf16.msra.mxu0 %v1842
    %2377 = vmatpush.bf16.msra.mxu0 %v1834
    %2378 = vmatpush.bf16.msra.mxu0 %v1826
    %2379 = vmatpush.bf16.msra.mxu0 %v1818
    %2380 = vmatpush.bf16.msra.mxu0 %v1810
    %2381 = vmatmul.bf16.gmra.mxu0 %v763
    %v2382 = vpop.f32.mrf.mxu0
    %v2383 = vadd.f32 %v1026, %v2382
    %v2384 = vpop.f32.mrf.mxu0
    %2385 = vdwg.mxu0
    %2386 = vmatpush.bf16.msra.mxu0 %v1930
    %2387 = vmatpush.bf16.msra.mxu0 %v1922
    %2388 = vmatpush.bf16.msra.mxu0 %v1914
    %2389 = vmatpush.bf16.msra.mxu0 %v1906
    %2390 = vmatpush.bf16.msra.mxu0 %v1898
    %2391 = vmatpush.bf16.msra.mxu0 %v1890
    %2392 = vmatpush.bf16.msra.mxu0 %v1882
    %2393 = vmatpush.bf16.msra.mxu0 %v1874
    %2394 = vmatmul.bf16.gmra.mxu0 %v764
    %v2395 = vpop.f32.mrf.mxu0
    %v2396 = vadd.f32 %v2383, %v2395
    %v2397 = vpop.f32.mrf.mxu0
    %2398 = vdwg.mxu0
    %2399 = vmatpush.bf16.msra.mxu0 %v1994
    %2400 = vmatpush.bf16.msra.mxu0 %v1986
    %2401 = vmatpush.bf16.msra.mxu0 %v1978
    %2402 = vmatpush.bf16.msra.mxu0 %v1970
    %2403 = vmatpush.bf16.msra.mxu0 %v1962
    %2404 = vmatpush.bf16.msra.mxu0 %v1954
    %2405 = vmatpush.bf16.msra.mxu0 %v1946
    %2406 = vmatpush.bf16.msra.mxu0 %v1938
    %2407 = vmatmul.bf16.gmra.mxu0 %v765
    %v2408 = vpop.f32.mrf.mxu0
    %v2409 = vadd.f32 %v2396, %v2408
    %v2410 = vpop.f32.mrf.mxu0
    %2411 = vdwg.mxu0
    %2412 = vmatpush.bf16.msra.mxu0 %v2058
    %2413 = vmatpush.bf16.msra.mxu0 %v2050
    %2414 = vmatpush.bf16.msra.mxu0 %v2042
    %2415 = vmatpush.bf16.msra.mxu0 %v2034
    %2416 = vmatpush.bf16.msra.mxu0 %v2026
    %2417 = vmatpush.bf16.msra.mxu0 %v2018
    %2418 = vmatpush.bf16.msra.mxu0 %v2010
    %2419 = vmatpush.bf16.msra.mxu0 %v2002
    %2420 = vmatmul.bf16.gmra.mxu0 %v766
    %v2421 = vpop.f32.mrf.mxu0
    %v2422 = vadd.f32 %v2409, %v2421
    %v2423 = vpop.f32.mrf.mxu0
    %2424 = vdwg.mxu0
    %2425 = vmatpush.bf16.msra.mxu0 %v1867
    %2426 = vmatpush.bf16.msra.mxu0 %v1859
    %2427 = vmatpush.bf16.msra.mxu0 %v1851
    %2428 = vmatpush.bf16.msra.mxu0 %v1843
    %2429 = vmatpush.bf16.msra.mxu0 %v1835
    %2430 = vmatpush.bf16.msra.mxu0 %v1827
    %2431 = vmatpush.bf16.msra.mxu0 %v1819
    %2432 = vmatpush.bf16.msra.mxu0 %v1811
    %2433 = vmatmul.bf16.gmra.mxu0 %v763
    %v2434 = vpop.f32.mrf.mxu0
    %v2435 = vadd.f32 %v1027, %v2434
    %v2436 = vpop.f32.mrf.mxu0
    %2437 = vdwg.mxu0
    %2438 = vmatpush.bf16.msra.mxu0 %v1931
    %2439 = vmatpush.bf16.msra.mxu0 %v1923
    %2440 = vmatpush.bf16.msra.mxu0 %v1915
    %2441 = vmatpush.bf16.msra.mxu0 %v1907
    %2442 = vmatpush.bf16.msra.mxu0 %v1899
    %2443 = vmatpush.bf16.msra.mxu0 %v1891
    %2444 = vmatpush.bf16.msra.mxu0 %v1883
    %2445 = vmatpush.bf16.msra.mxu0 %v1875
    %2446 = vmatmul.bf16.gmra.mxu0 %v764
    %v2447 = vpop.f32.mrf.mxu0
    %v2448 = vadd.f32 %v2435, %v2447
    %v2449 = vpop.f32.mrf.mxu0
    %2450 = vdwg.mxu0
    %2451 = vmatpush.bf16.msra.mxu0 %v1995
    %2452 = vmatpush.bf16.msra.mxu0 %v1987
    %2453 = vmatpush.bf16.msra.mxu0 %v1979
    %2454 = vmatpush.bf16.msra.mxu0 %v1971
    %2455 = vmatpush.bf16.msra.mxu0 %v1963
    %2456 = vmatpush.bf16.msra.mxu0 %v1955
    %2457 = vmatpush.bf16.msra.mxu0 %v1947
    %2458 = vmatpush.bf16.msra.mxu0 %v1939
    %2459 = vmatmul.bf16.gmra.mxu0 %v765
    %v2460 = vpop.f32.mrf.mxu0
    %v2461 = vadd.f32 %v2448, %v2460
    %v2462 = vpop.f32.mrf.mxu0
    %2463 = vdwg.mxu0
    %2464 = vmatpush.bf16.msra.mxu0 %v2059
    %2465 = vmatpush.bf16.msra.mxu0 %v2051
    %2466 = vmatpush.bf16.msra.mxu0 %v2043
    %2467 = vmatpush.bf16.msra.mxu0 %v2035
    %2468 = vmatpush.bf16.msra.mxu0 %v2027
    %2469 = vmatpush.bf16.msra.mxu0 %v2019
    %2470 = vmatpush.bf16.msra.mxu0 %v2011
    %2471 = vmatpush.bf16.msra.mxu0 %v2003
    %2472 = vmatmul.bf16.gmra.mxu0 %v766
    %v2473 = vpop.f32.mrf.mxu0
    %v2474 = vadd.f32 %v2461, %v2473
    %v2475 = vpop.f32.mrf.mxu0
    %2476 = vdwg.mxu0
    %2477 = vmatpush.bf16.msra.mxu0 %v1868
    %2478 = vmatpush.bf16.msra.mxu0 %v1860
    %2479 = vmatpush.bf16.msra.mxu0 %v1852
    %2480 = vmatpush.bf16.msra.mxu0 %v1844
    %2481 = vmatpush.bf16.msra.mxu0 %v1836
    %2482 = vmatpush.bf16.msra.mxu0 %v1828
    %2483 = vmatpush.bf16.msra.mxu0 %v1820
    %2484 = vmatpush.bf16.msra.mxu0 %v1812
    %2485 = vmatmul.bf16.gmra.mxu0 %v763
    %v2486 = vpop.f32.mrf.mxu0
    %v2487 = vadd.f32 %v1028, %v2486
    %v2488 = vpop.f32.mrf.mxu0
    %2489 = vdwg.mxu0
    %2490 = vmatpush.bf16.msra.mxu0 %v1932
    %2491 = vmatpush.bf16.msra.mxu0 %v1924
    %2492 = vmatpush.bf16.msra.mxu0 %v1916
    %2493 = vmatpush.bf16.msra.mxu0 %v1908
    %2494 = vmatpush.bf16.msra.mxu0 %v1900
    %2495 = vmatpush.bf16.msra.mxu0 %v1892
    %2496 = vmatpush.bf16.msra.mxu0 %v1884
    %2497 = vmatpush.bf16.msra.mxu0 %v1876
    %2498 = vmatmul.bf16.gmra.mxu0 %v764
    %v2499 = vpop.f32.mrf.mxu0
    %v2500 = vadd.f32 %v2487, %v2499
    %v2501 = vpop.f32.mrf.mxu0
    %2502 = vdwg.mxu0
    %2503 = vmatpush.bf16.msra.mxu0 %v1996
    %2504 = vmatpush.bf16.msra.mxu0 %v1988
    %2505 = vmatpush.bf16.msra.mxu0 %v1980
    %2506 = vmatpush.bf16.msra.mxu0 %v1972
    %2507 = vmatpush.bf16.msra.mxu0 %v1964
    %2508 = vmatpush.bf16.msra.mxu0 %v1956
    %2509 = vmatpush.bf16.msra.mxu0 %v1948
    %2510 = vmatpush.bf16.msra.mxu0 %v1940
    %2511 = vmatmul.bf16.gmra.mxu0 %v765
    %v2512 = vpop.f32.mrf.mxu0
    %v2513 = vadd.f32 %v2500, %v2512
    %v2514 = vpop.f32.mrf.mxu0
    %2515 = vdwg.mxu0
    %2516 = vmatpush.bf16.msra.mxu0 %v2060
    %2517 = vmatpush.bf16.msra.mxu0 %v2052
    %2518 = vmatpush.bf16.msra.mxu0 %v2044
    %2519 = vmatpush.bf16.msra.mxu0 %v2036
    %2520 = vmatpush.bf16.msra.mxu0 %v2028
    %2521 = vmatpush.bf16.msra.mxu0 %v2020
    %2522 = vmatpush.bf16.msra.mxu0 %v2012
    %2523 = vmatpush.bf16.msra.mxu0 %v2004
    %2524 = vmatmul.bf16.gmra.mxu0 %v766
    %v2525 = vpop.f32.mrf.mxu0
    %v2526 = vadd.f32 %v2513, %v2525
    %v2527 = vpop.f32.mrf.mxu0
    %2528 = vdwg.mxu0
    %2529 = vmatpush.bf16.msra.mxu0 %v1869
    %2530 = vmatpush.bf16.msra.mxu0 %v1861
    %2531 = vmatpush.bf16.msra.mxu0 %v1853
    %2532 = vmatpush.bf16.msra.mxu0 %v1845
    %2533 = vmatpush.bf16.msra.mxu0 %v1837
    %2534 = vmatpush.bf16.msra.mxu0 %v1829
    %2535 = vmatpush.bf16.msra.mxu0 %v1821
    %2536 = vmatpush.bf16.msra.mxu0 %v1813
    %2537 = vmatmul.bf16.gmra.mxu0 %v763
    %v2538 = vpop.f32.mrf.mxu0
    %v2539 = vadd.f32 %v1029, %v2538
    %v2540 = vpop.f32.mrf.mxu0
    %2541 = vdwg.mxu0
    %2542 = vmatpush.bf16.msra.mxu0 %v1933
    %2543 = vmatpush.bf16.msra.mxu0 %v1925
    %2544 = vmatpush.bf16.msra.mxu0 %v1917
    %2545 = vmatpush.bf16.msra.mxu0 %v1909
    %2546 = vmatpush.bf16.msra.mxu0 %v1901
    %2547 = vmatpush.bf16.msra.mxu0 %v1893
    %2548 = vmatpush.bf16.msra.mxu0 %v1885
    %2549 = vmatpush.bf16.msra.mxu0 %v1877
    %2550 = vmatmul.bf16.gmra.mxu0 %v764
    %v2551 = vpop.f32.mrf.mxu0
    %v2552 = vadd.f32 %v2539, %v2551
    %v2553 = vpop.f32.mrf.mxu0
    %2554 = vdwg.mxu0
    %2555 = vmatpush.bf16.msra.mxu0 %v1997
    %2556 = vmatpush.bf16.msra.mxu0 %v1989
    %2557 = vmatpush.bf16.msra.mxu0 %v1981
    %2558 = vmatpush.bf16.msra.mxu0 %v1973
    %2559 = vmatpush.bf16.msra.mxu0 %v1965
    %2560 = vmatpush.bf16.msra.mxu0 %v1957
    %2561 = vmatpush.bf16.msra.mxu0 %v1949
    %2562 = vmatpush.bf16.msra.mxu0 %v1941
    %2563 = vmatmul.bf16.gmra.mxu0 %v765
    %v2564 = vpop.f32.mrf.mxu0
    %v2565 = vadd.f32 %v2552, %v2564
    %v2566 = vpop.f32.mrf.mxu0
    %2567 = vdwg.mxu0
    %2568 = vmatpush.bf16.msra.mxu0 %v2061
    %2569 = vmatpush.bf16.msra.mxu0 %v2053
    %2570 = vmatpush.bf16.msra.mxu0 %v2045
    %2571 = vmatpush.bf16.msra.mxu0 %v2037
    %2572 = vmatpush.bf16.msra.mxu0 %v2029
    %2573 = vmatpush.bf16.msra.mxu0 %v2021
    %2574 = vmatpush.bf16.msra.mxu0 %v2013
    %2575 = vmatpush.bf16.msra.mxu0 %v2005
    %2576 = vmatmul.bf16.gmra.mxu0 %v766
    %v2577 = vpop.f32.mrf.mxu0
    %v2578 = vadd.f32 %v2565, %v2577
    %v2579 = vpop.f32.mrf.mxu0
    %2580 = vdwg.mxu0
    %2581 = vmatpush.bf16.msra.mxu0 %v1870
    %2582 = vmatpush.bf16.msra.mxu0 %v1862
    %2583 = vmatpush.bf16.msra.mxu0 %v1854
    %2584 = vmatpush.bf16.msra.mxu0 %v1846
    %2585 = vmatpush.bf16.msra.mxu0 %v1838
    %2586 = vmatpush.bf16.msra.mxu0 %v1830
    %2587 = vmatpush.bf16.msra.mxu0 %v1822
    %2588 = vmatpush.bf16.msra.mxu0 %v1814
    %2589 = vmatmul.bf16.gmra.mxu0 %v763
    %v2590 = vpop.f32.mrf.mxu0
    %v2591 = vadd.f32 %v1030, %v2590
    %v2592 = vpop.f32.mrf.mxu0
    %2593 = vdwg.mxu0
    %2594 = vmatpush.bf16.msra.mxu0 %v1934
    %2595 = vmatpush.bf16.msra.mxu0 %v1926
    %2596 = vmatpush.bf16.msra.mxu0 %v1918
    %2597 = vmatpush.bf16.msra.mxu0 %v1910
    %2598 = vmatpush.bf16.msra.mxu0 %v1902
    %2599 = vmatpush.bf16.msra.mxu0 %v1894
    %2600 = vmatpush.bf16.msra.mxu0 %v1886
    %2601 = vmatpush.bf16.msra.mxu0 %v1878
    %2602 = vmatmul.bf16.gmra.mxu0 %v764
    %v2603 = vpop.f32.mrf.mxu0
    %v2604 = vadd.f32 %v2591, %v2603
    %v2605 = vpop.f32.mrf.mxu0
    %2606 = vdwg.mxu0
    %2607 = vmatpush.bf16.msra.mxu0 %v1998
    %2608 = vmatpush.bf16.msra.mxu0 %v1990
    %2609 = vmatpush.bf16.msra.mxu0 %v1982
    %2610 = vmatpush.bf16.msra.mxu0 %v1974
    %2611 = vmatpush.bf16.msra.mxu0 %v1966
    %2612 = vmatpush.bf16.msra.mxu0 %v1958
    %2613 = vmatpush.bf16.msra.mxu0 %v1950
    %2614 = vmatpush.bf16.msra.mxu0 %v1942
    %2615 = vmatmul.bf16.gmra.mxu0 %v765
    %v2616 = vpop.f32.mrf.mxu0
    %v2617 = vadd.f32 %v2604, %v2616
    %v2618 = vpop.f32.mrf.mxu0
    %2619 = vdwg.mxu0
    %2620 = vmatpush.bf16.msra.mxu0 %v2062
    %2621 = vmatpush.bf16.msra.mxu0 %v2054
    %2622 = vmatpush.bf16.msra.mxu0 %v2046
    %2623 = vmatpush.bf16.msra.mxu0 %v2038
    %2624 = vmatpush.bf16.msra.mxu0 %v2030
    %2625 = vmatpush.bf16.msra.mxu0 %v2022
    %2626 = vmatpush.bf16.msra.mxu0 %v2014
    %2627 = vmatpush.bf16.msra.mxu0 %v2006
    %2628 = vmatmul.bf16.gmra.mxu0 %v766
    %v2629 = vpop.f32.mrf.mxu0
    %v2630 = vadd.f32 %v2617, %v2629
    %v2631 = vpop.f32.mrf.mxu0
    %2632 = vdwg.mxu0
    %2633 = vmatpush.bf16.msra.mxu0 %v1871
    %2634 = vmatpush.bf16.msra.mxu0 %v1863
    %2635 = vmatpush.bf16.msra.mxu0 %v1855
    %2636 = vmatpush.bf16.msra.mxu0 %v1847
    %2637 = vmatpush.bf16.msra.mxu0 %v1839
    %2638 = vmatpush.bf16.msra.mxu0 %v1831
    %2639 = vmatpush.bf16.msra.mxu0 %v1823
    %2640 = vmatpush.bf16.msra.mxu0 %v1815
    %2641 = vmatmul.bf16.gmra.mxu0 %v763
    %v2642 = vpop.f32.mrf.mxu0
    %v2643 = vadd.f32 %v1031, %v2642
    %v2644 = vpop.f32.mrf.mxu0
    %2645 = vdwg.mxu0
    %2646 = vmatpush.bf16.msra.mxu0 %v1935
    %2647 = vmatpush.bf16.msra.mxu0 %v1927
    %2648 = vmatpush.bf16.msra.mxu0 %v1919
    %2649 = vmatpush.bf16.msra.mxu0 %v1911
    %2650 = vmatpush.bf16.msra.mxu0 %v1903
    %2651 = vmatpush.bf16.msra.mxu0 %v1895
    %2652 = vmatpush.bf16.msra.mxu0 %v1887
    %2653 = vmatpush.bf16.msra.mxu0 %v1879
    %2654 = vmatmul.bf16.gmra.mxu0 %v764
    %v2655 = vpop.f32.mrf.mxu0
    %v2656 = vadd.f32 %v2643, %v2655
    %v2657 = vpop.f32.mrf.mxu0
    %2658 = vdwg.mxu0
    %2659 = vmatpush.bf16.msra.mxu0 %v1999
    %2660 = vmatpush.bf16.msra.mxu0 %v1991
    %2661 = vmatpush.bf16.msra.mxu0 %v1983
    %2662 = vmatpush.bf16.msra.mxu0 %v1975
    %2663 = vmatpush.bf16.msra.mxu0 %v1967
    %2664 = vmatpush.bf16.msra.mxu0 %v1959
    %2665 = vmatpush.bf16.msra.mxu0 %v1951
    %2666 = vmatpush.bf16.msra.mxu0 %v1943
    %2667 = vmatmul.bf16.gmra.mxu0 %v765
    %v2668 = vpop.f32.mrf.mxu0
    %v2669 = vadd.f32 %v2656, %v2668
    %v2670 = vpop.f32.mrf.mxu0
    %2671 = vdwg.mxu0
    %2672 = vmatpush.bf16.msra.mxu0 %v2063
    %2673 = vmatpush.bf16.msra.mxu0 %v2055
    %2674 = vmatpush.bf16.msra.mxu0 %v2047
    %2675 = vmatpush.bf16.msra.mxu0 %v2039
    %2676 = vmatpush.bf16.msra.mxu0 %v2031
    %2677 = vmatpush.bf16.msra.mxu0 %v2023
    %2678 = vmatpush.bf16.msra.mxu0 %v2015
    %2679 = vmatpush.bf16.msra.mxu0 %v2007
    %2680 = vmatmul.bf16.gmra.mxu0 %v766
    %v2681 = vpop.f32.mrf.mxu0
    %v2682 = vadd.f32 %v2669, %v2681
    %v2683 = vpop.f32.mrf.mxu0
    %2684 = vdwg.mxu0
    %2685 = vmatpush.bf16.msra.mxu0 %v1872
    %2686 = vmatpush.bf16.msra.mxu0 %v1864
    %2687 = vmatpush.bf16.msra.mxu0 %v1856
    %2688 = vmatpush.bf16.msra.mxu0 %v1848
    %2689 = vmatpush.bf16.msra.mxu0 %v1840
    %2690 = vmatpush.bf16.msra.mxu0 %v1832
    %2691 = vmatpush.bf16.msra.mxu0 %v1824
    %2692 = vmatpush.bf16.msra.mxu0 %v1816
    %2693 = vmatmul.bf16.gmra.mxu0 %v763
    %v2694 = vpop.f32.mrf.mxu0
    %v2695 = vadd.f32 %v1032, %v2694
    %v2696 = vpop.f32.mrf.mxu0
    %2697 = vdwg.mxu0
    %2698 = vmatpush.bf16.msra.mxu0 %v1936
    %2699 = vmatpush.bf16.msra.mxu0 %v1928
    %2700 = vmatpush.bf16.msra.mxu0 %v1920
    %2701 = vmatpush.bf16.msra.mxu0 %v1912
    %2702 = vmatpush.bf16.msra.mxu0 %v1904
    %2703 = vmatpush.bf16.msra.mxu0 %v1896
    %2704 = vmatpush.bf16.msra.mxu0 %v1888
    %2705 = vmatpush.bf16.msra.mxu0 %v1880
    %2706 = vmatmul.bf16.gmra.mxu0 %v764
    %v2707 = vpop.f32.mrf.mxu0
    %v2708 = vadd.f32 %v2695, %v2707
    %v2709 = vpop.f32.mrf.mxu0
    %2710 = vdwg.mxu0
    %2711 = vmatpush.bf16.msra.mxu0 %v2000
    %2712 = vmatpush.bf16.msra.mxu0 %v1992
    %2713 = vmatpush.bf16.msra.mxu0 %v1984
    %2714 = vmatpush.bf16.msra.mxu0 %v1976
    %2715 = vmatpush.bf16.msra.mxu0 %v1968
    %2716 = vmatpush.bf16.msra.mxu0 %v1960
    %2717 = vmatpush.bf16.msra.mxu0 %v1952
    %2718 = vmatpush.bf16.msra.mxu0 %v1944
    %2719 = vmatmul.bf16.gmra.mxu0 %v765
    %v2720 = vpop.f32.mrf.mxu0
    %v2721 = vadd.f32 %v2708, %v2720
    %v2722 = vpop.f32.mrf.mxu0
    %2723 = vdwg.mxu0
    %2724 = vmatpush.bf16.msra.mxu0 %v2064
    %2725 = vmatpush.bf16.msra.mxu0 %v2056
    %2726 = vmatpush.bf16.msra.mxu0 %v2048
    %2727 = vmatpush.bf16.msra.mxu0 %v2040
    %2728 = vmatpush.bf16.msra.mxu0 %v2032
    %2729 = vmatpush.bf16.msra.mxu0 %v2024
    %2730 = vmatpush.bf16.msra.mxu0 %v2016
    %2731 = vmatpush.bf16.msra.mxu0 %v2008
    %2732 = vmatmul.bf16.gmra.mxu0 %v766
    %v2733 = vpop.f32.mrf.mxu0
    %v2734 = vadd.f32 %v2721, %v2733
    %v2735 = vpop.f32.mrf.mxu0
    %2736 = vdwg.mxu0
    %v2737 = vtanh.pop %v2370
    %v2738 = vtanh.pop %v2422
    %v2739 = vtanh.pop %v2474
    %v2740 = vtanh.pop %v2526
    %v2741 = vtanh.pop %v2578
    %v2742 = vtanh.pop %v2630
    %v2743 = vtanh.pop %v2682
    %v2744 = vtanh.pop %v2734
    %2745 = vst [vmem:[#allocation14] sm:$0xff] %v2737
    %2746 = vst [vmem:[#allocation14 + $0x8] sm:$0xff] %v2738
    %2747 = vst [vmem:[#allocation14 + $0x10] sm:$0xff] %v2739
    %2748 = vst [vmem:[#allocation14 + $0x18] sm:$0xff] %v2740
    %2749 = vst [vmem:[#allocation14 + $0x20] sm:$0xff] %v2741
    %2750 = vst [vmem:[#allocation14 + $0x28] sm:$0xff] %v2742
    %2751 = vst [vmem:[#allocation14 + $0x30] sm:$0xff] %v2743
    %2752 = vst [vmem:[#allocation14 + $0x38] sm:$0xff] %v2744
    // Predicated region
    $region58: #{tpu_custom_call.1} parent=1 // pred_check
      _
    $region59: #{tpu_custom_call.1} parent=1 // pred_check_branch
      %2754 = sbr.rel (0) target = $region61
    $region60: #{tpu_custom_call.1} parent=1 // pred_region
      %2756 = vsyncadd [#allocation4], 0
      %s2758 = sshll.u32 [#allocation14], 4
      %s2759 = int_to_ptr.vmem [resolvable:$true] %s2758
      %s2760 = sshll.u32 %s7, 4
      %s2761 = int_to_ptr.hbm [resolvable:$true] %s2760
      %2763 = dma.vmem_to_hbm [thread:$0]  %s2759, 1024, %s2761, [#allocation4]
    $region61: #{tpu_custom_call.1} parent=1 // pred_fallthru
      _
    // Predicated region
    $region62: #{tpu_custom_call.1} parent=1 // pred_check
      _
    $region63: #{tpu_custom_call.1} parent=1 // pred_check_branch
      %2765 = sbr.rel (0) target = $region65
    $region64: #{tpu_custom_call.1} parent=1 // pred_region
      %2767 = dma.done [#allocation4], 1024
    $region65: #{tpu_custom_call.1} parent=1 // pred_fallthru
      _
    %2768 = vsyncpa [#allocation3], 1
    %2769 = vsyncpa [#allocation6], 1
    %2770 = vsyncpa [#allocation9], 1
    %2771 = vsyncpa [#allocation12], 1
    %2772 = vsyncpa [#allocation4], 1

</llo_original>
